<compile_context>
chip_gen: v6e
topology: v6e:2x2x1
jax: 0.10.0
libtpu: 0.0.40
codegen_flags: <defaults>
</compile_context>

<pallas_src>
import functools

import jax
import jax.numpy as jnp
from jax.experimental import pallas as pl
from jax.experimental.pallas import tpu as pltpu


def _round_up(v, m):
    return ((v + m - 1) // m) * m


def _vmem_limit_bytes():
    """Per-generation scoped-VMEM budget (v7x: 64 MiB physical, v5e/v6e: 128 MiB)."""
    try:
        info = pltpu.get_tpu_info()
        cap = getattr(info, "vmem_capacity_bytes", None)
        if cap:
            return int(min(cap - 16 * 1024 * 1024, 100 * 1024 * 1024))
    except Exception:
        pass
    return 48 * 1024 * 1024  # safe on every generation


def _pick_tile(n):
    """Largest tile in {512, 256, 128} that keeps >=2 row tiles (megacore on v7x)
    and <=25% extra zero-padding; small graphs fall back to 128."""
    n128 = _round_up(n, 128)
    for t in (512, 256):
        n_pad = _round_up(n, t)
        if n_pad // t >= 2 and (n_pad - n128) * 4 <= n128:
            return t
    return 128


def _l1_vmem(tm, tk, n_pad, f_pad, h_pad, o_pad, x_resident):
    """Rough VMEM working-set estimate for kernel 1 (double-buffered operands)."""
    db = 2
    xk = n_pad * f_pad * 2 if x_resident else tk * f_pad * 2
    b = db * (tm * tk * 2                 # A tile (bf16)
              + tm * f_pad * 2            # x (dest rows)
              + xk                        # x (source rows)
              + 2 * f_pad * h_pad * 2     # W1_self, W1_neigh
              + 2 * h_pad * o_pad * 2     # W2_self, W2_neigh
              + (h_pad + o_pad) * 4       # b1, b2
              + tm * o_pad * (4 + 2))     # o_init (f32) + hn (bf16) outputs
    return b + tm * f_pad * 4             # f32 neighbor accumulator scratch


def _l2_vmem(tm, tk, n_pad, o_pad, hn_resident):
    db = 2
    hnk = n_pad * o_pad * 2 if hn_resident else tk * o_pad * 2
    return db * (tm * tk * 2 + tm * o_pad * 4 + hnk + tm * o_pad * 4)


# --------------------------------------------------------------------------- #
# Kernel 1: layer-1 SAGEConv + ReLU, plus both layer-2 projections of h:
#   o_init = h @ W2_self + b2   (f32)   and   hn = h @ W2_neigh   (bf16),
# so h never round-trips through HBM.
# grid = (n_pad // tm, n_pad // tk); axis 0 = destination rows (parallel),
# axis 1 = source-column reduction (arbitrary).
# --------------------------------------------------------------------------- #
def _sage_layer1_kernel(a_ref, xs_ref, xk_ref, w1s_ref, w1n_ref, b1_ref,
                        w2s_ref, w2n_ref, b2_ref,
                        o_init_ref, hn_ref, acc_ref, *, x_resident, tk):
    k = pl.program_id(1)

    @pl.when(k == 0)
    def _init():
        acc_ref[...] = jnp.zeros(acc_ref.shape, jnp.float32)

    if x_resident:
        xk = xk_ref[pl.ds(pl.multiple_of(k * tk, tk), tk), :]
    else:
        xk = xk_ref[...]

    # neigh += A_norm[i-tile, k-tile] @ x[k-tile]   (bf16 x bf16 -> f32 on the MXU)
    acc_ref[...] += jnp.dot(a_ref[...], xk, preferred_element_type=jnp.float32)

    @pl.when(k == pl.num_programs(1) - 1)
    def _finalize():
        neigh_bf = acc_ref[...].astype(jnp.bfloat16)
        h = (jnp.dot(xs_ref[...], w1s_ref[...], preferred_element_type=jnp.float32)
             + jnp.dot(neigh_bf, w1n_ref[...], preferred_element_type=jnp.float32)
             + b1_ref[...])
        h_bf = jnp.maximum(h, 0.0).astype(jnp.bfloat16)       # ReLU
        hn_ref[...] = jnp.dot(h_bf, w2n_ref[...],
                              preferred_element_type=jnp.float32).astype(jnp.bfloat16)
        o_init_ref[...] = jnp.dot(h_bf, w2s_ref[...],
                                  preferred_element_type=jnp.float32) + b2_ref[...]


# --------------------------------------------------------------------------- #
# Kernel 2: layer-2 neighbor stream:  out = o_init + A_norm @ hn
# o_init is aliased with the output, so the kernel is a pure accumulate stream.
# --------------------------------------------------------------------------- #
def _sage_layer2_kernel(a_ref, o_init_ref, hnk_ref, o_ref, *, hn_resident, tk):
    k = pl.program_id(1)

    @pl.when(k == 0)
    def _init():
        o_ref[...] = o_init_ref[...]

    if hn_resident:
        hnk = hnk_ref[pl.ds(pl.multiple_of(k * tk, tk), tk), :]
    else:
        hnk = hnk_ref[...]

    o_ref[...] += jnp.dot(a_ref[...], hnk, preferred_element_type=jnp.float32)


@functools.partial(jax.jit, static_argnames=("tile",))
def sage_forward(adj, x, params, *, tile=None):
    """GraphSAGE forward.

    adj: [N, N] dense adjacency (adj[v, u] != 0  <=>  edge u -> v).
    x:   [N, in_feats] node features.
    """
    n, in_feats = x.shape
    hid = params["w1_self"].shape[1]
    out_feats = params["w2_self"].shape[1]

    f_pad = _round_up(in_feats, 128)
    h_pad = _round_up(hid, 128)
    o_pad = _round_up(out_feats, 128)

    vmem_limit = _vmem_limit_bytes()
    budget = int(0.75 * vmem_limit)

    tm = tk = _pick_tile(n) if tile is None else int(tile)
    # Shrink the tile if even the streaming working set would not fit the budget.
    while tm > 128 and _l1_vmem(tm, tk, _round_up(n, tm), f_pad, h_pad, o_pad,
                                False) > budget:
        tm = tk = max(128, tm // 2)
    n_pad = _round_up(n, tm)

    x_resident = _l1_vmem(tm, tk, n_pad, f_pad, h_pad, o_pad, True) <= budget
    hn_resident = _l2_vmem(tm, tk, n_pad, o_pad, True) <= budget

    # ---- wrapper prep (fused under jit): degrees, row-normalize, pad, bf16 cast ----
    adj_f32 = adj.astype(jnp.float32)
    deg = jnp.sum(adj_f32, axis=-1, keepdims=True)
    inv_deg = jnp.where(deg > 0.0, 1.0 / jnp.maximum(deg, 1.0), 0.0)

    def pad2(m, rows, cols):
        return jnp.pad(m, ((0, rows - m.shape[0]), (0, cols - m.shape[1])))

    a_bf = pad2(adj_f32 * inv_deg, n_pad, n_pad).astype(jnp.bfloat16)
    x_bf = pad2(x.astype(jnp.float32), n_pad, f_pad).astype(jnp.bfloat16)
    w1s = pad2(params["w1_self"].astype(jnp.float32), f_pad, h_pad).astype(jnp.bfloat16)
    w1n = pad2(params["w1_neigh"].astype(jnp.float32), f_pad, h_pad).astype(jnp.bfloat16)
    b1 = pad2(params["b1"].reshape(1, -1).astype(jnp.float32), 1, h_pad)
    w2s = pad2(params["w2_self"].astype(jnp.float32), h_pad, o_pad).astype(jnp.bfloat16)
    w2n = pad2(params["w2_neigh"].astype(jnp.float32), h_pad, o_pad).astype(jnp.bfloat16)
    b2 = pad2(params["b2"].reshape(1, -1).astype(jnp.float32), 1, o_pad)

    grid = (n_pad // tm, n_pad // tk)
    cparams = pltpu.CompilerParams(
        dimension_semantics=("parallel", "arbitrary"),
        vmem_limit_bytes=vmem_limit)

    # ---- layer 1 (+ both layer-2 projections of h) ----
    xk_spec = (pl.BlockSpec((n_pad, f_pad), lambda i, k: (0, 0)) if x_resident
               else pl.BlockSpec((tk, f_pad), lambda i, k: (k, 0)))

    o_init, hn_bf = pl.pallas_call(
        functools.partial(_sage_layer1_kernel, x_resident=x_resident, tk=tk),
        out_shape=(jax.ShapeDtypeStruct((n_pad, o_pad), jnp.float32),
                   jax.ShapeDtypeStruct((n_pad, o_pad), jnp.bfloat16)),
        grid=grid,
        in_specs=[
            pl.BlockSpec((tm, tk), lambda i, k: (i, k)),           # A_norm tile
            pl.BlockSpec((tm, f_pad), lambda i, k: (i, 0)),        # x (dest rows)
            xk_spec,                                               # x (source rows)
            pl.BlockSpec((f_pad, h_pad), lambda i, k: (0, 0)),     # W1_self
            pl.BlockSpec((f_pad, h_pad), lambda i, k: (0, 0)),     # W1_neigh
            pl.BlockSpec((1, h_pad), lambda i, k: (0, 0)),         # b1
            pl.BlockSpec((h_pad, o_pad), lambda i, k: (0, 0)),     # W2_self
            pl.BlockSpec((h_pad, o_pad), lambda i, k: (0, 0)),     # W2_neigh
            pl.BlockSpec((1, o_pad), lambda i, k: (0, 0)),         # b2
        ],
        out_specs=(pl.BlockSpec((tm, o_pad), lambda i, k: (i, 0)),
                   pl.BlockSpec((tm, o_pad), lambda i, k: (i, 0))),
        scratch_shapes=[pltpu.VMEM((tm, f_pad), jnp.float32)],
        compiler_params=cparams,
    )(a_bf, x_bf, x_bf, w1s, w1n, b1, w2s, w2n, b2)

    # ---- layer 2: out = o_init + A_norm @ hn ----
    hnk_spec = (pl.BlockSpec((n_pad, o_pad), lambda i, k: (0, 0)) if hn_resident
                else pl.BlockSpec((tk, o_pad), lambda i, k: (k, 0)))

    out_pad = pl.pallas_call(
        functools.partial(_sage_layer2_kernel, hn_resident=hn_resident, tk=tk),
        out_shape=jax.ShapeDtypeStruct((n_pad, o_pad), jnp.float32),
        grid=grid,
        in_specs=[
            pl.BlockSpec((tm, tk), lambda i, k: (i, k)),           # A_norm tile
            pl.BlockSpec((tm, o_pad), lambda i, k: (i, 0)),        # o_init (dest rows)
            hnk_spec,                                              # hn (source rows)
        ],
        out_specs=pl.BlockSpec((tm, o_pad), lambda i, k: (i, 0)),
        input_output_aliases={1: 0},                               # o_init -> out
        compiler_params=cparams,
    )(a_bf, o_init, hn_bf)

    return out_pad[:n, :out_feats]


def init_params(key, in_feats, hid_feats, out_feats):
    """Xavier-uniform init matching DGL SAGEConv parameter shapes (biases zero)."""
    ks = jax.random.split(key, 4)

    def xavier(k, fan_in, fan_out):
        bound = jnp.sqrt(6.0 / (fan_in + fan_out))
        return jax.random.uniform(k, (fan_in, fan_out), jnp.float32, -bound, bound)

    return {
        "w1_self":  xavier(ks[0], in_feats, hid_feats),
        "w1_neigh": xavier(ks[1], in_feats, hid_feats),
        "b1":       jnp.zeros((1, hid_feats), jnp.float32),
        "w2_self":  xavier(ks[2], hid_feats, out_feats),
        "w2_neigh": xavier(ks[3], hid_feats, out_feats),
        "b2":       jnp.zeros((1, out_feats), jnp.float32),
    }


def _reference(adj, x, params):
    """Pure-JAX reference with the same bf16 operand quantization / f32 accumulation."""
    def bf(v):
        return v.astype(jnp.bfloat16).astype(jnp.float32)

    deg = jnp.sum(adj, axis=-1, keepdims=True)
    inv_deg = jnp.where(deg > 0.0, 1.0 / jnp.maximum(deg, 1.0), 0.0)
    a_n = bf(adj * inv_deg)
    xb = bf(x)
    neigh1 = bf(a_n @ xb)
    h = jnp.maximum(xb @ bf(params["w1_self"])
                    + neigh1 @ bf(params["w1_neigh"]) + params["b1"], 0.0)
    h = bf(h)
    hn = bf(h @ bf(params["w2_neigh"]))
    return h @ bf(params["w2_self"]) + a_n @ hn + params["b2"]


if __name__ == "__main__":
    key = jax.random.PRNGKey(0)

    # Case 0: N=200 -> tile 128, grid (2, 2).   Case 1: N=640 -> tile 256, grid (3, 3).
    cases = [(200, 8, 32, 16), (640, 12, 48, 24)]
    for idx, (N, IN_F, HID_F, OUT_F) in enumerate(cases):
        k_adj, k_x, k_p = jax.random.split(jax.random.fold_in(key, idx), 3)

        adj = jax.random.bernoulli(k_adj, p=0.05, shape=(N, N)).astype(jnp.float32)
        x = jax.random.normal(k_x, (N, IN_F), jnp.float32)
        params = init_params(k_p, IN_F, HID_F, OUT_F)

        out = sage_forward(adj, x, params)
        jax.block_until_ready(out)
        assert out.shape == (N, OUT_F) and out.dtype == jnp.float32

        ref = _reference(adj, x, params)
        max_err = float(jnp.max(jnp.abs(out - ref)))
        assert jnp.allclose(out, ref, atol=1e-2, rtol=1e-2), (
            f"case {idx}: mismatch vs reference, max abs err = {max_err}")

    print("KERNEL_OK")
</pallas_src>

<mosaic_0001>
module attributes {stable_mosaic.version = 11 : i64} {
  func.func @_sage_layer2_kernel(%arg0: i32, %arg1: i32, %arg2: memref<128x128xbf16, #tpu.memory_space<vmem>>, %arg3: memref<128x128xf32, #tpu.memory_space<vmem>>, %arg4: memref<256x128xbf16, #tpu.memory_space<vmem>>, %arg5: memref<128x128xf32, #tpu.memory_space<vmem>>) attributes {dimension_semantics = [#tpu.dimension_semantics<parallel>, #tpu.dimension_semantics<arbitrary>], iteration_bounds = array<i64: 2, 2>, scalar_prefetch = 0 : i64, scratch_operands = 0 : i64, tpu.core_type = #tpu.core_type<tc>, window_params = [{transform_indices = @transform_0, window_bounds = array<i64: 128, 128>}, {transform_indices = @transform_1, window_bounds = array<i64: 128, 128>}, {pipeline_mode = #tpu.pipeline_mode<synchronous>, transform_indices = @transform_2, window_bounds = array<i64: 256, 128>}, {transform_indices = @transform_3, window_bounds = array<i64: 128, 128>}]} {
    %c0_i32 = arith.constant 0 : i32
    %0 = arith.cmpi eq, %arg1, %c0_i32 : i32
    %1 = arith.extui %0 : i1 to i32
    %c0_i32_0 = arith.constant 0 : i32
    %2 = arith.cmpi ne, %1, %c0_i32_0 : i32
    scf.if %2 {
      %c0_7 = arith.constant 0 : index
      %c0_8 = arith.constant 0 : index
      %12 = vector.load %arg3[%c0_7, %c0_8] : memref<128x128xf32, #tpu.memory_space<vmem>>, vector<128x128xf32>
      %c0_9 = arith.constant 0 : index
      %c0_10 = arith.constant 0 : index
      %13 = vector.load %arg5[%c0_9, %c0_10] : memref<128x128xf32, #tpu.memory_space<vmem>>, vector<128x128xf32>
      tpu.vector_store %arg5[%c0_9, %c0_10], %12 {strides = array<i32>} : memref<128x128xf32, #tpu.memory_space<vmem>>, vector<128x128xf32>,
    } else {
    }
    %c128_i32 = arith.constant 128 : i32
    %3 = arith.muli %arg1, %c128_i32 : i32
    %4 = tpu.assume_multiple %3, 128 : i32
    %5 = arith.index_cast %4 : i32 to index
    %c0 = arith.constant 0 : index
    %6 = vector.load %arg4[%5, %c0] : memref<256x128xbf16, #tpu.memory_space<vmem>>, vector<128x128xbf16>
    %c0_1 = arith.constant 0 : index
    %c0_2 = arith.constant 0 : index
    %7 = vector.load %arg5[%c0_1, %c0_2] : memref<128x128xf32, #tpu.memory_space<vmem>>, vector<128x128xf32>
    %c0_3 = arith.constant 0 : index
    %c0_4 = arith.constant 0 : index
    %8 = vector.load %arg2[%c0_3, %c0_4] : memref<128x128xbf16, #tpu.memory_space<vmem>>, vector<128x128xbf16>
    %cst = arith.constant dense<0.000000e+00> : vector<128x128xf32>
    %9 = tpu.matmul %8, %6, %cst {dimension_numbers = #tpu.dot_dimension_numbers<[1], [0], [0], [1], [0, 0, 1, 1], [], []>} : vector<128x128xbf16>, vector<128x128xbf16>, vector<128x128xf32> -> vector<128x128xf32>
    %10 = arith.addf %7, %9 : vector<128x128xf32>
    %c0_5 = arith.constant 0 : index
    %c0_6 = arith.constant 0 : index
    %11 = vector.load %arg5[%c0_5, %c0_6] : memref<128x128xf32, #tpu.memory_space<vmem>>, vector<128x128xf32>
    tpu.vector_store %arg5[%c0_5, %c0_6], %10 {strides = array<i32>} : memref<128x128xf32, #tpu.memory_space<vmem>>, vector<128x128xf32>,
    return
  }
  func.func @transform_0(%arg0: i32, %arg1: i32) -> (i32, i32) {
    %c0_i32 = arith.constant 0 : i32
    return %arg0, %arg1 : i32, i32
  }
  func.func @transform_1(%arg0: i32, %arg1: i32) -> (i32, i32) {
    %c0_i32 = arith.constant 0 : i32
    %c0_i32_0 = arith.constant 0 : i32
    return %arg0, %c0_i32 : i32, i32
  }
  func.func @transform_2(%arg0: i32, %arg1: i32) -> (i32, i32) {
    %c0_i32 = arith.constant 0 : i32
    %c0_i32_0 = arith.constant 0 : i32
    %c0_i32_1 = arith.constant 0 : i32
    return %c0_i32, %c0_i32_0 : i32, i32
  }
  func.func @transform_3(%arg0: i32, %arg1: i32) -> (i32, i32) {
    %c0_i32 = arith.constant 0 : i32
    %c0_i32_0 = arith.constant 0 : i32
    return %arg0, %c0_i32 : i32, i32
  }
}

module attributes {stable_mosaic.version = 11 : i64} {
  func.func @_sage_layer1_kernel(%arg0: i32, %arg1: i32, %arg2: memref<128x128xbf16, #tpu.memory_space<vmem>>, %arg3: memref<128x128xbf16, #tpu.memory_space<vmem>>, %arg4: memref<256x128xbf16, #tpu.memory_space<vmem>>, %arg5: memref<128x128xbf16, #tpu.memory_space<vmem>>, %arg6: memref<128x128xbf16, #tpu.memory_space<vmem>>, %arg7: memref<1x128xf32, #tpu.memory_space<vmem>>, %arg8: memref<128x128xbf16, #tpu.memory_space<vmem>>, %arg9: memref<128x128xbf16, #tpu.memory_space<vmem>>, %arg10: memref<1x128xf32, #tpu.memory_space<vmem>>, %arg11: memref<128x128xf32, #tpu.memory_space<vmem>>, %arg12: memref<128x128xbf16, #tpu.memory_space<vmem>>, %arg13: memref<128x128xf32, #tpu.memory_space<vmem>>) attributes {dimension_semantics = [#tpu.dimension_semantics<parallel>, #tpu.dimension_semantics<arbitrary>], iteration_bounds = array<i64: 2, 2>, scalar_prefetch = 0 : i64, scratch_operands = 1 : i64, tpu.core_type = #tpu.core_type<tc>, window_params = [{transform_indices = @transform_0, window_bounds = array<i64: 128, 128>}, {transform_indices = @transform_1, window_bounds = array<i64: 128, 128>}, {pipeline_mode = #tpu.pipeline_mode<synchronous>, transform_indices = @transform_2, window_bounds = array<i64: 256, 128>}, {pipeline_mode = #tpu.pipeline_mode<synchronous>, transform_indices = @transform_3, window_bounds = array<i64: 128, 128>}, {pipeline_mode = #tpu.pipeline_mode<synchronous>, transform_indices = @transform_4, window_bounds = array<i64: 128, 128>}, {pipeline_mode = #tpu.pipeline_mode<synchronous>, transform_indices = @transform_5, window_bounds = array<i64: 1, 128>}, {pipeline_mode = #tpu.pipeline_mode<synchronous>, transform_indices = @transform_6, window_bounds = array<i64: 128, 128>}, {pipeline_mode = #tpu.pipeline_mode<synchronous>, transform_indices = @transform_7, window_bounds = array<i64: 128, 128>}, {pipeline_mode = #tpu.pipeline_mode<synchronous>, transform_indices = @transform_8, window_bounds = array<i64: 1, 128>}, {transform_indices = @transform_9, window_bounds = array<i64: 128, 128>}, {transform_indices = @transform_10, window_bounds = array<i64: 128, 128>}]} {
    %c0_i32 = arith.constant 0 : i32
    %0 = arith.cmpi eq, %arg1, %c0_i32 : i32
    %1 = arith.extui %0 : i1 to i32
    %c0_i32_0 = arith.constant 0 : i32
    %2 = arith.cmpi ne, %1, %c0_i32_0 : i32
    scf.if %2 {
      %cst_8 = arith.constant 0.000000e+00 : f32
      %15 = vector.broadcast %cst_8 : f32 to vector<128x128xf32>
      %c0_9 = arith.constant 0 : index
      %c0_10 = arith.constant 0 : index
      %16 = vector.load %arg13[%c0_9, %c0_10] : memref<128x128xf32, #tpu.memory_space<vmem>>, vector<128x128xf32>
      tpu.vector_store %arg13[%c0_9, %c0_10], %15 {strides = array<i32>} : memref<128x128xf32, #tpu.memory_space<vmem>>, vector<128x128xf32>,
    } else {
    }
    %c128_i32 = arith.constant 128 : i32
    %3 = arith.muli %arg1, %c128_i32 : i32
    %4 = tpu.assume_multiple %3, 128 : i32
    %5 = arith.index_cast %4 : i32 to index
    %c0 = arith.constant 0 : index
    %6 = vector.load %arg4[%5, %c0] : memref<256x128xbf16, #tpu.memory_space<vmem>>, vector<128x128xbf16>
    %c0_1 = arith.constant 0 : index
    %c0_2 = arith.constant 0 : index
    %7 = vector.load %arg13[%c0_1, %c0_2] : memref<128x128xf32, #tpu.memory_space<vmem>>, vector<128x128xf32>
    %c0_3 = arith.constant 0 : index
    %c0_4 = arith.constant 0 : index
    %8 = vector.load %arg2[%c0_3, %c0_4] : memref<128x128xbf16, #tpu.memory_space<vmem>>, vector<128x128xbf16>
    %cst = arith.constant dense<0.000000e+00> : vector<128x128xf32>
    %9 = tpu.matmul %8, %6, %cst {dimension_numbers = #tpu.dot_dimension_numbers<[1], [0], [0], [1], [0, 0, 1, 1], [], []>} : vector<128x128xbf16>, vector<128x128xbf16>, vector<128x128xf32> -> vector<128x128xf32>
    %10 = arith.addf %7, %9 : vector<128x128xf32>
    %c0_5 = arith.constant 0 : index
    %c0_6 = arith.constant 0 : index
    %11 = vector.load %arg13[%c0_5, %c0_6] : memref<128x128xf32, #tpu.memory_space<vmem>>, vector<128x128xf32>
    tpu.vector_store %arg13[%c0_5, %c0_6], %10 {strides = array<i32>} : memref<128x128xf32, #tpu.memory_space<vmem>>, vector<128x128xf32>,
    %c1_i32 = arith.constant 1 : i32
    %12 = arith.cmpi eq, %arg1, %c1_i32 : i32
    %13 = arith.extui %12 : i1 to i32
    %c0_i32_7 = arith.constant 0 : i32
    %14 = arith.cmpi ne, %13, %c0_i32_7 : i32
    scf.if %14 {
      %c0_8 = arith.constant 0 : index
      %c0_9 = arith.constant 0 : index
      %15 = vector.load %arg13[%c0_8, %c0_9] : memref<128x128xf32, #tpu.memory_space<vmem>>, vector<128x128xf32>
      %16 = arith.truncf %15 : vector<128x128xf32> to vector<128x128xbf16>
      %c0_10 = arith.constant 0 : index
      %c0_11 = arith.constant 0 : index
      %17 = vector.load %arg3[%c0_10, %c0_11] : memref<128x128xbf16, #tpu.memory_space<vmem>>, vector<128x128xbf16>
      %c0_12 = arith.constant 0 : index
      %c0_13 = arith.constant 0 : index
      %18 = vector.load %arg5[%c0_12, %c0_13] : memref<128x128xbf16, #tpu.memory_space<vmem>>, vector<128x128xbf16>
      %cst_14 = arith.constant dense<0.000000e+00> : vector<128x128xf32>
      %19 = tpu.matmul %17, %18, %cst_14 {dimension_numbers = #tpu.dot_dimension_numbers<[1], [0], [0], [1], [0, 0, 1, 1], [], []>} : vector<128x128xbf16>, vector<128x128xbf16>, vector<128x128xf32> -> vector<128x128xf32>
      %c0_15 = arith.constant 0 : index
      %c0_16 = arith.constant 0 : index
      %20 = vector.load %arg6[%c0_15, %c0_16] : memref<128x128xbf16, #tpu.memory_space<vmem>>, vector<128x128xbf16>
      %cst_17 = arith.constant dense<0.000000e+00> : vector<128x128xf32>
      %21 = tpu.matmul %16, %20, %cst_17 {dimension_numbers = #tpu.dot_dimension_numbers<[1], [0], [0], [1], [0, 0, 1, 1], [], []>} : vector<128x128xbf16>, vector<128x128xbf16>, vector<128x128xf32> -> vector<128x128xf32>
      %22 = arith.addf %19, %21 : vector<128x128xf32>
      %c0_18 = arith.constant 0 : index
      %c0_19 = arith.constant 0 : index
      %23 = vector.load %arg7[%c0_18, %c0_19] : memref<1x128xf32, #tpu.memory_space<vmem>>, vector<1x128xf32>
      %24 = vector.broadcast %23 : vector<1x128xf32> to vector<128x128xf32>
      %25 = arith.addf %22, %24 : vector<128x128xf32>
      %cst_20 = arith.constant 0.000000e+00 : f32
      %26 = vector.broadcast %cst_20 : f32 to vector<128x128xf32>
      %27 = arith.maximumf %25, %26 : vector<128x128xf32>
      %28 = arith.truncf %27 : vector<128x128xf32> to vector<128x128xbf16>
      %c0_21 = arith.constant 0 : index
      %c0_22 = arith.constant 0 : index
      %29 = vector.load %arg9[%c0_21, %c0_22] : memref<128x128xbf16, #tpu.memory_space<vmem>>, vector<128x128xbf16>
      %cst_23 = arith.constant dense<0.000000e+00> : vector<128x128xf32>
      %30 = tpu.matmul %28, %29, %cst_23 {dimension_numbers = #tpu.dot_dimension_numbers<[1], [0], [0], [1], [0, 0, 1, 1], [], []>} : vector<128x128xbf16>, vector<128x128xbf16>, vector<128x128xf32> -> vector<128x128xf32>
      %31 = arith.truncf %30 : vector<128x128xf32> to vector<128x128xbf16>
      %c0_24 = arith.constant 0 : index
      %c0_25 = arith.constant 0 : index
      %32 = vector.load %arg12[%c0_24, %c0_25] : memref<128x128xbf16, #tpu.memory_space<vmem>>, vector<128x128xbf16>
      tpu.vector_store %arg12[%c0_24, %c0_25], %31 {strides = array<i32>} : memref<128x128xbf16, #tpu.memory_space<vmem>>, vector<128x128xbf16>,
      %c0_26 = arith.constant 0 : index
      %c0_27 = arith.constant 0 : index
      %33 = vector.load %arg8[%c0_26, %c0_27] : memref<128x128xbf16, #tpu.memory_space<vmem>>, vector<128x128xbf16>
      %cst_28 = arith.constant dense<0.000000e+00> : vector<128x128xf32>
      %34 = tpu.matmul %28, %33, %cst_28 {dimension_numbers = #tpu.dot_dimension_numbers<[1], [0], [0], [1], [0, 0, 1, 1], [], []>} : vector<128x128xbf16>, vector<128x128xbf16>, vector<128x128xf32> -> vector<128x128xf32>
      %c0_29 = arith.constant 0 : index
      %c0_30 = arith.constant 0 : index
      %35 = vector.load %arg10[%c0_29, %c0_30] : memref<1x128xf32, #tpu.memory_space<vmem>>, vector<1x128xf32>
      %36 = vector.broadcast %35 : vector<1x128xf32> to vector<128x128xf32>
      %37 = arith.addf %34, %36 : vector<128x128xf32>
      %c0_31 = arith.constant 0 : index
      %c0_32 = arith.constant 0 : index
      %38 = vector.load %arg11[%c0_31, %c0_32] : memref<128x128xf32, #tpu.memory_space<vmem>>, vector<128x128xf32>
      tpu.vector_store %arg11[%c0_31, %c0_32], %37 {strides = array<i32>} : memref<128x128xf32, #tpu.memory_space<vmem>>, vector<128x128xf32>,
    } else {
    }
    return
  }
  func.func @transform_0(%arg0: i32, %arg1: i32) -> (i32, i32) {
    %c0_i32 = arith.constant 0 : i32
    return %arg0, %arg1 : i32, i32
  }
  func.func @transform_1(%arg0: i32, %arg1: i32) -> (i32, i32) {
    %c0_i32 = arith.constant 0 : i32
    %c0_i32_0 = arith.constant 0 : i32
    return %arg0, %c0_i32 : i32, i32
  }
  func.func @transform_2(%arg0: i32, %arg1: i32) -> (i32, i32) {
    %c0_i32 = arith.constant 0 : i32
    %c0_i32_0 = arith.constant 0 : i32
    %c0_i32_1 = arith.constant 0 : i32
    return %c0_i32, %c0_i32_0 : i32, i32
  }
  func.func @transform_3(%arg0: i32, %arg1: i32) -> (i32, i32) {
    %c0_i32 = arith.constant 0 : i32
    %c0_i32_0 = arith.constant 0 : i32
    %c0_i32_1 = arith.constant 0 : i32
    return %c0_i32, %c0_i32_0 : i32, i32
  }
  func.func @transform_4(%arg0: i32, %arg1: i32) -> (i32, i32) {
    %c0_i32 = arith.constant 0 : i32
    %c0_i32_0 = arith.constant 0 : i32
    %c0_i32_1 = arith.constant 0 : i32
    return %c0_i32, %c0_i32_0 : i32, i32
  }
  func.func @transform_5(%arg0: i32, %arg1: i32) -> (i32, i32) {
    %c0_i32 = arith.constant 0 : i32
    %c0_i32_0 = arith.constant 0 : i32
    %c0_i32_1 = arith.constant 0 : i32
    return %c0_i32, %c0_i32_0 : i32, i32
  }
  func.func @transform_6(%arg0: i32, %arg1: i32) -> (i32, i32) {
    %c0_i32 = arith.constant 0 : i32
    %c0_i32_0 = arith.constant 0 : i32
    %c0_i32_1 = arith.constant 0 : i32
    return %c0_i32, %c0_i32_0 : i32, i32
  }
  func.func @transform_7(%arg0: i32, %arg1: i32) -> (i32, i32) {
    %c0_i32 = arith.constant 0 : i32
    %c0_i32_0 = arith.constant 0 : i32
    %c0_i32_1 = arith.constant 0 : i32
    return %c0_i32, %c0_i32_0 : i32, i32
  }
  func.func @transform_8(%arg0: i32, %arg1: i32) -> (i32, i32) {
    %c0_i32 = arith.constant 0 : i32
    %c0_i32_0 = arith.constant 0 : i32
    %c0_i32_1 = arith.constant 0 : i32
    return %c0_i32, %c0_i32_0 : i32, i32
  }
  func.func @transform_9(%arg0: i32, %arg1: i32) -> (i32, i32) {
    %c0_i32 = arith.constant 0 : i32
    %c0_i32_0 = arith.constant 0 : i32
    return %arg0, %c0_i32 : i32, i32
  }
  func.func @transform_10(%arg0: i32, %arg1: i32) -> (i32, i32) {
    %c0_i32 = arith.constant 0 : i32
    %c0_i32_0 = arith.constant 0 : i32
    return %arg0, %c0_i32 : i32, i32
  }
}

</mosaic_0001>

<llo_original>
// kernel: sage_forward.3
$region0: #{sage_forward.3}
  #allocation0 [shape = 'u32[]', space=smem, size = 0x4, offset = 0x4, fixed_abs, tag = 'smem constant byte address 0x4 - core index']
  #allocation1 [shape = 'u32[144,128]{1,0:T(1,128)}', space=vmem, size = 0x12000, scoped, tag = 'internal scratch']
  %s0 = inlined_call_operand.vmem [shape: bf16[256,256], index: 0, kind: input, shape index: {}]
  %s1 = inlined_call_operand.vmem [shape: f32[256,128], index: 1, kind: input, shape index: {}, may-alias: {1,3}]
  %s2 = inlined_call_operand.vmem [shape: bf16[256,128], index: 2, kind: input, shape index: {}]
  %s3 = inlined_call_operand.vmem [shape: f32[256,128], index: 3, kind: output, shape index: {}, may-alias: {1,3}]
  %s4 = sld [smem:[#allocation0]]
  $region90: #{sage_forward.3} parent=0
    _
  %s6 = ssub.s32 1, %s4
  %s7 = scalar_select 0, %s6, %s4
  $region1: #{sage_forward.3} parent=0
    #allocation2 [shape = 'u8[65536]{0}', space=vmem, size = 0x10000, scoped, tag = 'input window, operand 0']
    loop: start=0, step=1, limit=6
    $region2: #{sage_forward.3} parent=1 // loop_pre_header
      _
    $region3: #{sage_forward.3} parent=1 // loop_header
      %s9 = sphi 0, %s13
      %p10 = scmp.ge.s32.totalorder %s9, 6
      %s16 = sphi 0, %s28
      %s17 = sphi 0, %s24
      %s18 = sphi 0, %s16
      %s19 = sphi 0, %s17
      %s20 = sphi 0, %s18
      %s21 = sphi 0, %s19
      %s33 = sphi 0, %s35
      %s36 = sphi 0, %s33
      %s37 = sphi 0, %s36
      %s53 = sphi 0, %s37
      %s59 = sphi 0, %s61
      %s62 = sphi 0, %s59
      %s63 = sphi 0, %s62
      %s79 = sphi 0, %s63
      %s83 = sphi 0, %s83
      %s85 = sphi 0, %s83
      %s86 = sphi 0, %s85
      %s100 = sphi 0, %s86
      %s106 = sphi 0, %s108
      %s109 = sphi 0, %s106
      %s110 = sphi 0, %s109
      %s126 = sphi 0, %s110
    $region4: #{sage_forward.3} parent=1 // loop_header_branch
      %12 = sbr.rel (%p10) target = $region8
    $region5: #{sage_forward.3} parent=1 // loop_body
      %s14 = ssub.s32 %s9, 1
      %s15 = ssub.s32 %s9, 2
      %s22 = sadd.s32 1, %s17
      %p23 = scmp.ge.s32.totalorder %s22, 2
      %s24 = scalar_select %p23, 0, %s22
      %s25 = sadd.s32 1, %s16
      %s26 = scalar_select %p23, %s25, %s16
      %p27 = scmp.ge.s32.totalorder %s26, 2
      %s28 = scalar_select %p27, 0, %s26
      %s29 = ssub.s32 %s16, %s28
      %s30 = ssub.s32 %s17, %s24
      %s31 = sor.u32 %s29, %s30
      %p32 = scmp.eq.s32.totalorder %s31, 0
      %s34 = sadd.s32 %s33, 1
      %s35 = scalar_select %p32, %s33, %s34
      %p38 = pneg %p32
      %p39 = scmp.eq.s32.totalorder %s9, 3
      %p40 = por %p38, %p39
      %p41 = scmp.ne.s32.totalorder %s33, %s36
      %p42 = scmp.eq.s32.totalorder %s9, 0
      %p43 = por %p41, %p42
      %p44 = scmp.ne.s32.totalorder %s33, %s36
      %p45 = scmp.eq.s32.totalorder %s14, 3
      %p46 = por %p44, %p45
      %p47 = scmp.ne.s32.totalorder %s36, %s37
      %p48 = scmp.eq.s32.totalorder %s14, 0
      %p49 = por %p47, %p48
      %p50 = scmp.ne.s32.totalorder %s36, %s37
      %p51 = scmp.eq.s32.totalorder %s15, 3
      %p52 = por %p50, %p51
      %p54 = scmp.ne.s32.totalorder %s37, %s53
      %p55 = scmp.eq.s32.totalorder %s15, 0
      %p56 = por %p54, %p55
      %s57 = ssub.s32 %s16, %s28
      %p58 = scmp.eq.s32.totalorder %s57, 0
      %s60 = sadd.s32 %s59, 1
      %s61 = scalar_select %p58, %s59, %s60
      %p64 = pneg %p58
      %p65 = scmp.eq.s32.totalorder %s9, 3
      %p66 = por %p64, %p65
      %p67 = scmp.ne.s32.totalorder %s59, %s62
      %p68 = scmp.eq.s32.totalorder %s9, 0
      %p69 = por %p67, %p68
      %p70 = scmp.ne.s32.totalorder %s59, %s62
      %p71 = scmp.eq.s32.totalorder %s14, 3
      %p72 = por %p70, %p71
      %p73 = scmp.ne.s32.totalorder %s62, %s63
      %p74 = scmp.eq.s32.totalorder %s14, 0
      %p75 = por %p73, %p74
      %p76 = scmp.ne.s32.totalorder %s62, %s63
      %p77 = scmp.eq.s32.totalorder %s15, 3
      %p78 = por %p76, %p77
      %p80 = scmp.ne.s32.totalorder %s63, %s79
      %p81 = scmp.eq.s32.totalorder %s15, 0
      %p82 = por %p80, %p81
      %s84 = sadd.s32 %s83, 1
      %p87 = scmp.eq.s32.totalorder %s9, 3
      %p88 = scmp.ne.s32.totalorder %s83, %s85
      %p89 = scmp.eq.s32.totalorder %s9, 0
      %p90 = por %p88, %p89
      %p91 = scmp.ne.s32.totalorder %s83, %s85
      %p92 = scmp.eq.s32.totalorder %s14, 3
      %p93 = por %p91, %p92
      %p94 = scmp.ne.s32.totalorder %s85, %s86
      %p95 = scmp.eq.s32.totalorder %s14, 0
      %p96 = por %p94, %p95
      %p97 = scmp.ne.s32.totalorder %s85, %s86
      %p98 = scmp.eq.s32.totalorder %s15, 3
      %p99 = por %p97, %p98
      %p101 = scmp.ne.s32.totalorder %s86, %s100
      %p102 = scmp.eq.s32.totalorder %s15, 0
      %p103 = por %p101, %p102
      %s104 = ssub.s32 %s16, %s28
      %p105 = scmp.eq.s32.totalorder %s104, 0
      %s107 = sadd.s32 %s106, 1
      %s108 = scalar_select %p105, %s106, %s107
      %p111 = pneg %p105
      %p112 = scmp.eq.s32.totalorder %s9, 3
      %p113 = por %p111, %p112
      %p114 = scmp.ne.s32.totalorder %s106, %s109
      %p115 = scmp.eq.s32.totalorder %s9, 0
      %p116 = por %p114, %p115
      %p117 = scmp.ne.s32.totalorder %s106, %s109
      %p118 = scmp.eq.s32.totalorder %s14, 3
      %p119 = por %p117, %p118
      %p120 = scmp.ne.s32.totalorder %s109, %s110
      %p121 = scmp.eq.s32.totalorder %s14, 0
      %p122 = por %p120, %p121
      %p123 = scmp.ne.s32.totalorder %s109, %s110
      %p124 = scmp.eq.s32.totalorder %s15, 3
      %p125 = por %p123, %p124
      %p127 = scmp.ne.s32.totalorder %s110, %s126
      %p128 = scmp.eq.s32.totalorder %s15, 0
      %p129 = por %p127, %p128
      %p130 = scmp.le.s32.totalorder 1, %s9
      %p131 = scmp.lt.s32.totalorder %s9, 5
      %p132 = pnand %p130, %p131
      %p133 = pneg %p132
      // Predicated region
      $region9: #{sage_forward.3} parent=5 // pred_check
        _
      $region10: #{sage_forward.3} parent=5 // pred_check_branch
        %135 = sbr.rel (%p132) target = $region12
      $region11: #{sage_forward.3} parent=5 // pred_region
        %s136 = ssub.s32 %s9, 1
        // Predicated region
        $region13: #{sage_forward.3} parent=11 // pred_check
          %p137 = pneg %p96
        $region14: #{sage_forward.3} parent=11 // pred_check_branch
          %139 = sbr.rel (%p137) target = $region16
        $region15: #{sage_forward.3} parent=11 // pred_region
          _
        $region16: #{sage_forward.3} parent=11 // pred_fallthru
          _
      $region12: #{sage_forward.3} parent=5 // pred_fallthru
        _
      %p140 = scmp.lt.s32.totalorder %s9, 4
      // Predicated region
      $region17: #{sage_forward.3} parent=5 // pred_check
        %p141 = pneg %p140
      $region18: #{sage_forward.3} parent=5 // pred_check_branch
        %143 = sbr.rel (%p141) target = $region20
      $region19: #{sage_forward.3} parent=5 // pred_region
        // Predicated region
        $region21: #{sage_forward.3} parent=19 // pred_check
          %p144 = pneg %p43
        $region22: #{sage_forward.3} parent=19 // pred_check_branch
          %146 = sbr.rel (%p144) target = $region24
        $region23: #{sage_forward.3} parent=19 // pred_region
          %s147 = sand.u32 %s33, 1
          %s148 = sand.u32 %s33, 1
          %s149 = smul.addr %s148, 64
          %s150 = scalar_lea.vmem [#allocation2], %s149
          %s151 = smul.u32 16, %s16
          %s152 = smul.addr %s151, 2
          %s153 = sadd.s32 %s17, %s152
          %s154 = smul.addr %s153, 4
          %s155 = scalar_lea.vmem %s0, %s154
          // Predicated region
          $region25: #{sage_forward.3} parent=23 // pred_check
            _
          $region26: #{sage_forward.3} parent=23 // pred_check_branch
            %157 = sbr.rel (0) target = $region28
          $region27: #{sage_forward.3} parent=23 // pred_region
            // Predicated region
            $region29: #{sage_forward.3} parent=27 // pred_check
              _
            $region30: #{sage_forward.3} parent=27 // pred_check_branch
              %159 = sbr.rel target = $region32
            $region31: #{sage_forward.3} parent=27 // pred_region
              // Predicated region
              $region44: #{sage_forward.3} parent=31 // pred_check
                _
              $region45: #{sage_forward.3} parent=31 // pred_check_branch
                %205 = sbr.rel (0) target = $region47
              $region46: #{sage_forward.3} parent=31 // pred_region
                loop: start=0, step=1, limit=1
                $region48: #{sage_forward.3} parent=46 // loop_pre_header
                  _
                $region49: #{sage_forward.3} parent=46 // loop_header
                  %s207 = sphi 0, %s211
                  %p208 = scmp.ge.s32.totalorder %s207, 1
                  %s212 = sphi %s155, %s155
                  %s213 = sphi %s150, %s150
                $region50: #{sage_forward.3} parent=46 // loop_header_branch
                  %210 = sbr.rel (%p208) target = $region54
                $region51: #{sage_forward.3} parent=46 // loop_body
                  _
                $region52: #{sage_forward.3} parent=46 // loop_footer
                  %s211 = sadd.s32 1, %s207
                $region53: #{sage_forward.3} parent=46 // loop_footer_branch
                  %206 = sbr.rel target = $region49
                $region54: #{sage_forward.3} parent=46 // loop_exit
                  _
                %s215 = ssub.s32 16, 1
                loop: start=0, step=1, limit=1
                $region55: #{sage_forward.3} parent=46 // loop_pre_header
                  _
                $region56: #{sage_forward.3} parent=46 // loop_header
                  %s217 = sphi 0, %s221
                  %p218 = scmp.ge.s32.totalorder %s217, 1
                  %s222 = sphi %s155, %s155
                  %s223 = sphi %s150, %s150
                $region57: #{sage_forward.3} parent=46 // loop_header_branch
                  %220 = sbr.rel (%p218) target = $region61
                $region58: #{sage_forward.3} parent=46 // loop_body
                  %v224 = vld [vmem:[%s222] sm:%s215]
                  %225 = vst [vmem:[%s223] sm:%s215] %v224
                  %v226 = vld [vmem:[%s222 + $0x8] sm:%s215]
                  %227 = vst [vmem:[%s223 + $0x4] sm:%s215] %v226
                  %v228 = vld [vmem:[%s222 + $0x10] sm:%s215]
                  %229 = vst [vmem:[%s223 + $0x8] sm:%s215] %v228
                  %v230 = vld [vmem:[%s222 + $0x18] sm:%s215]
                  %231 = vst [vmem:[%s223 + $0xc] sm:%s215] %v230
                  %v232 = vld [vmem:[%s222 + $0x20] sm:%s215]
                  %233 = vst [vmem:[%s223 + $0x10] sm:%s215] %v232
                  %v234 = vld [vmem:[%s222 + $0x28] sm:%s215]
                  %235 = vst [vmem:[%s223 + $0x14] sm:%s215] %v234
                  %v236 = vld [vmem:[%s222 + $0x30] sm:%s215]
                  %237 = vst [vmem:[%s223 + $0x18] sm:%s215] %v236
                  %v238 = vld [vmem:[%s222 + $0x38] sm:%s215]
                  %239 = vst [vmem:[%s223 + $0x1c] sm:%s215] %v238
                  %v240 = vld [vmem:[%s222 + $0x40] sm:%s215]
                  %241 = vst [vmem:[%s223 + $0x20] sm:%s215] %v240
                  %v242 = vld [vmem:[%s222 + $0x48] sm:%s215]
                  %243 = vst [vmem:[%s223 + $0x24] sm:%s215] %v242
                  %v244 = vld [vmem:[%s222 + $0x50] sm:%s215]
                  %245 = vst [vmem:[%s223 + $0x28] sm:%s215] %v244
                  %v246 = vld [vmem:[%s222 + $0x58] sm:%s215]
                  %247 = vst [vmem:[%s223 + $0x2c] sm:%s215] %v246
                  %v248 = vld [vmem:[%s222 + $0x60] sm:%s215]
                  %249 = vst [vmem:[%s223 + $0x30] sm:%s215] %v248
                  %v250 = vld [vmem:[%s222 + $0x68] sm:%s215]
                  %251 = vst [vmem:[%s223 + $0x34] sm:%s215] %v250
                  %v252 = vld [vmem:[%s222 + $0x70] sm:%s215]
                  %253 = vst [vmem:[%s223 + $0x38] sm:%s215] %v252
                  %v254 = vld [vmem:[%s222 + $0x78] sm:%s215]
                  %255 = vst [vmem:[%s223 + $0x3c] sm:%s215] %v254
                $region59: #{sage_forward.3} parent=46 // loop_footer
                  %s221 = sadd.s32 1, %s217
                $region60: #{sage_forward.3} parent=46 // loop_footer_branch
                  %216 = sbr.rel target = $region56
                $region61: #{sage_forward.3} parent=46 // loop_exit
                  _
              $region47: #{sage_forward.3} parent=31 // pred_fallthru
                _
            $region32: #{sage_forward.3} parent=27 // pred_fallthru
              _
            // Predicated region
            $region33: #{sage_forward.3} parent=27 // pred_check
              _
            $region34: #{sage_forward.3} parent=27 // pred_check_branch
              %161 = sbr.rel (0) target = $region36
            $region35: #{sage_forward.3} parent=27 // pred_region
              %s163 = ssub.s32 16, 1
              loop: start=0, step=1, limit=1
              $region37: #{sage_forward.3} parent=35 // loop_pre_header
                _
              $region38: #{sage_forward.3} parent=35 // loop_header
                %s165 = sphi 0, %s169
                %p166 = scmp.ge.s32.totalorder %s165, 1
                %s170 = sphi %s155, %s155
                %s171 = sphi %s150, %s150
              $region39: #{sage_forward.3} parent=35 // loop_header_branch
                %168 = sbr.rel (%p166) target = $region43
              $region40: #{sage_forward.3} parent=35 // loop_body
                %v172 = vld [vmem:[%s170] sm:%s163]
                %173 = vst [vmem:[%s171] sm:%s163] %v172
                %v174 = vld [vmem:[%s170 + $0x8] sm:%s163]
                %175 = vst [vmem:[%s171 + $0x4] sm:%s163] %v174
                %v176 = vld [vmem:[%s170 + $0x10] sm:%s163]
                %177 = vst [vmem:[%s171 + $0x8] sm:%s163] %v176
                %v178 = vld [vmem:[%s170 + $0x18] sm:%s163]
                %179 = vst [vmem:[%s171 + $0xc] sm:%s163] %v178
                %v180 = vld [vmem:[%s170 + $0x20] sm:%s163]
                %181 = vst [vmem:[%s171 + $0x10] sm:%s163] %v180
                %v182 = vld [vmem:[%s170 + $0x28] sm:%s163]
                %183 = vst [vmem:[%s171 + $0x14] sm:%s163] %v182
                %v184 = vld [vmem:[%s170 + $0x30] sm:%s163]
                %185 = vst [vmem:[%s171 + $0x18] sm:%s163] %v184
                %v186 = vld [vmem:[%s170 + $0x38] sm:%s163]
                %187 = vst [vmem:[%s171 + $0x1c] sm:%s163] %v186
                %v188 = vld [vmem:[%s170 + $0x40] sm:%s163]
                %189 = vst [vmem:[%s171 + $0x20] sm:%s163] %v188
                %v190 = vld [vmem:[%s170 + $0x48] sm:%s163]
                %191 = vst [vmem:[%s171 + $0x24] sm:%s163] %v190
                %v192 = vld [vmem:[%s170 + $0x50] sm:%s163]
                %193 = vst [vmem:[%s171 + $0x28] sm:%s163] %v192
                %v194 = vld [vmem:[%s170 + $0x58] sm:%s163]
                %195 = vst [vmem:[%s171 + $0x2c] sm:%s163] %v194
                %v196 = vld [vmem:[%s170 + $0x60] sm:%s163]
                %197 = vst [vmem:[%s171 + $0x30] sm:%s163] %v196
                %v198 = vld [vmem:[%s170 + $0x68] sm:%s163]
                %199 = vst [vmem:[%s171 + $0x34] sm:%s163] %v198
                %v200 = vld [vmem:[%s170 + $0x70] sm:%s163]
                %201 = vst [vmem:[%s171 + $0x38] sm:%s163] %v200
                %v202 = vld [vmem:[%s170 + $0x78] sm:%s163]
                %203 = vst [vmem:[%s171 + $0x3c] sm:%s163] %v202
              $region41: #{sage_forward.3} parent=35 // loop_footer
                %s169 = sadd.s32 1, %s165
              $region42: #{sage_forward.3} parent=35 // loop_footer_branch
                %164 = sbr.rel target = $region38
              $region43: #{sage_forward.3} parent=35 // loop_exit
                _
            $region36: #{sage_forward.3} parent=27 // pred_fallthru
              _
          $region28: #{sage_forward.3} parent=23 // pred_fallthru
            _
          %256 = vnop
        $region24: #{sage_forward.3} parent=19 // pred_fallthru
          _
        // Predicated region
        $region62: #{sage_forward.3} parent=19 // pred_check
          %p257 = pneg %p69
        $region63: #{sage_forward.3} parent=19 // pred_check_branch
          %259 = sbr.rel (%p257) target = $region65
        $region64: #{sage_forward.3} parent=19 // pred_region
          %s260 = smul.u32 16, %s16
          %p261 = scmp.lt.s32.totalorder %s260, 31
          %s262 = scalar_select %p261, %s260, 31
          %s263 = smul.addr %s262, 8
          %s264 = scalar_lea.vmem %s1, %s263
          %s265 = smul.u32 16, %s16
        $region65: #{sage_forward.3} parent=19 // pred_fallthru
          _
      $region20: #{sage_forward.3} parent=5 // pred_fallthru
        _
      %p266 = scmp.le.s32.totalorder 1, %s9
      %p267 = scmp.lt.s32.totalorder %s9, 5
      %p268 = pnand %p266, %p267
      %p269 = pneg %p268
      // Predicated region
      $region66: #{sage_forward.3} parent=5 // pred_check
        _
      $region67: #{sage_forward.3} parent=5 // pred_check_branch
        %271 = sbr.rel (%p268) target = $region69
      $region68: #{sage_forward.3} parent=5 // pred_region
        %s272 = ssub.s32 %s9, 1
        %s273 = sand.u32 %s36, 1
        %s274 = sand.u32 %s36, 1
        %s275 = smul.addr %s274, 64
        %s276 = scalar_lea.vmem [#allocation2], %s275
        // Predicated region
        $region70: #{sage_forward.3} parent=68 // pred_check
          %p277 = pneg %p49
        $region71: #{sage_forward.3} parent=68 // pred_check_branch
          %279 = sbr.rel (%p277) target = $region73
        $region72: #{sage_forward.3} parent=68 // pred_region
          _
        $region73: #{sage_forward.3} parent=68 // pred_fallthru
          _
        %s280 = sand.u32 %s36, 1
        %s281 = sand.u32 %s36, 1
        %s282 = smul.addr %s281, 64
        %s283 = scalar_lea.vmem [#allocation2], %s282
        %p284 = pneg %p49
        %p285 = pneg %p46
        %s286 = smul.u32 16, %s18
        %p287 = scmp.lt.s32.totalorder %s286, 31
        %s288 = scalar_select %p287, %s286, 31
        %s289 = smul.addr %s288, 8
        %s290 = scalar_lea.vmem %s1, %s289
        %p291 = pneg %p75
        %p292 = pneg %p72
        %p293 = pneg %p96
        %p294 = pneg %p93
        %p295 = pneg %p122
        %p296 = pneg %p119
        %s297 = smul.u32 16, %s18
        %p298 = scmp.lt.s32.totalorder %s297, 31
        %s299 = scalar_select %p298, %s297, 31
        %s300 = smul.addr %s299, 8
        %s301 = scalar_lea.vmem %s3, %s300
        %s302 = smul.u32 16, %s18
        %s303 = smul.u32 16, %s18
        %p304 = scmp.lt.s32.totalorder %s303, 31
        %s305 = scalar_select %p304, %s303, 31
        %s306 = smul.addr %s305, 8
        %s307 = scalar_lea.vmem %s1, %s306
        %s308 = smul.u32 16, %s18
        %s309 = smul.u32 16, %s18
        %p310 = scmp.lt.s32.totalorder %s309, 31
        %s311 = scalar_select %p310, %s309, 31
        %s312 = smul.addr %s311, 8
        %s313 = scalar_lea.vmem %s3, %s312
        %s314 = smul.u32 16, %s18
        %p316 = scmp.eq.s32.totalorder %s19, 0
        // Predicated region
        $region74: #{sage_forward.3} parent=68 // pred_check
          %p317 = pneg %p316
        $region75: #{sage_forward.3} parent=68 // pred_check_branch
          %319 = sbr.rel (%p317) target = $region77
        $region76: #{sage_forward.3} parent=68 // pred_region
          %v320 = vld [vmem:[%s307] sm:$0xff]
          %v321 = vld [vmem:[%s307 + $0x8] sm:$0xff]
          %v322 = vld [vmem:[%s307 + $0x10] sm:$0xff]
          %v323 = vld [vmem:[%s307 + $0x18] sm:$0xff]
          %v324 = vld [vmem:[%s307 + $0x20] sm:$0xff]
          %v325 = vld [vmem:[%s307 + $0x28] sm:$0xff]
          %v326 = vld [vmem:[%s307 + $0x30] sm:$0xff]
          %v327 = vld [vmem:[%s307 + $0x38] sm:$0xff]
          %v328 = vld [vmem:[%s307 + $0x40] sm:$0xff]
          %v329 = vld [vmem:[%s307 + $0x48] sm:$0xff]
          %v330 = vld [vmem:[%s307 + $0x50] sm:$0xff]
          %v331 = vld [vmem:[%s307 + $0x58] sm:$0xff]
          %v332 = vld [vmem:[%s307 + $0x60] sm:$0xff]
          %v333 = vld [vmem:[%s307 + $0x68] sm:$0xff]
          %v334 = vld [vmem:[%s307 + $0x70] sm:$0xff]
          %v335 = vld [vmem:[%s307 + $0x78] sm:$0xff]
          %336 = vst [vmem:[%s313] sm:$0xff] %v320
          %337 = vst [vmem:[%s313 + $0x8] sm:$0xff] %v321
          %338 = vst [vmem:[%s313 + $0x10] sm:$0xff] %v322
          %339 = vst [vmem:[%s313 + $0x18] sm:$0xff] %v323
          %340 = vst [vmem:[%s313 + $0x20] sm:$0xff] %v324
          %341 = vst [vmem:[%s313 + $0x28] sm:$0xff] %v325
          %342 = vst [vmem:[%s313 + $0x30] sm:$0xff] %v326
          %343 = vst [vmem:[%s313 + $0x38] sm:$0xff] %v327
          %344 = vst [vmem:[%s313 + $0x40] sm:$0xff] %v328
          %345 = vst [vmem:[%s313 + $0x48] sm:$0xff] %v329
          %346 = vst [vmem:[%s313 + $0x50] sm:$0xff] %v330
          %347 = vst [vmem:[%s313 + $0x58] sm:$0xff] %v331
          %348 = vst [vmem:[%s313 + $0x60] sm:$0xff] %v332
          %349 = vst [vmem:[%s313 + $0x68] sm:$0xff] %v333
          %350 = vst [vmem:[%s313 + $0x70] sm:$0xff] %v334
          %351 = vst [vmem:[%s313 + $0x78] sm:$0xff] %v335
        $region77: #{sage_forward.3} parent=68 // pred_fallthru
          _
        %s352 = smul.u32 %s19, 128
        %s353 = sshra.s32 %s352, 3
        %s354 = sand.u32 %s352, 7
        %s355 = smul.addr %s353, 4
        %s356 = scalar_lea.vmem %s2, %s355
        %v357 = vld [vmem:[%s356] sm:$0xf]
        %v358 = vld [vmem:[%s356 + $0x4] sm:$0xf]
        %v359 = vld [vmem:[%s356 + $0x8] sm:$0xf]
        %v360 = vld [vmem:[%s356 + $0xc] sm:$0xf]
        %v361 = vld [vmem:[%s356 + $0x10] sm:$0xf]
        %v362 = vld [vmem:[%s356 + $0x14] sm:$0xf]
        %v363 = vld [vmem:[%s356 + $0x18] sm:$0xf]
        %v364 = vld [vmem:[%s356 + $0x1c] sm:$0xf]
        %v365 = vld [vmem:[%s356 + $0x20] sm:$0xf]
        %v366 = vld [vmem:[%s356 + $0x24] sm:$0xf]
        %v367 = vld [vmem:[%s356 + $0x28] sm:$0xf]
        %v368 = vld [vmem:[%s356 + $0x2c] sm:$0xf]
        %v369 = vld [vmem:[%s356 + $0x30] sm:$0xf]
        %v370 = vld [vmem:[%s356 + $0x34] sm:$0xf]
        %v371 = vld [vmem:[%s356 + $0x38] sm:$0xf]
        %v372 = vld [vmem:[%s356 + $0x3c] sm:$0xf]
        %v373 = vld [vmem:[%s313] sm:$0xff]
        %v374 = vld [vmem:[%s313 + $0x8] sm:$0xff]
        %v375 = vld [vmem:[%s313 + $0x10] sm:$0xff]
        %v376 = vld [vmem:[%s313 + $0x18] sm:$0xff]
        %v377 = vld [vmem:[%s313 + $0x20] sm:$0xff]
        %v378 = vld [vmem:[%s313 + $0x28] sm:$0xff]
        %v379 = vld [vmem:[%s313 + $0x30] sm:$0xff]
        %v380 = vld [vmem:[%s313 + $0x38] sm:$0xff]
        %v381 = vld [vmem:[%s313 + $0x40] sm:$0xff]
        %v382 = vld [vmem:[%s313 + $0x48] sm:$0xff]
        %v383 = vld [vmem:[%s313 + $0x50] sm:$0xff]
        %v384 = vld [vmem:[%s313 + $0x58] sm:$0xff]
        %v385 = vld [vmem:[%s313 + $0x60] sm:$0xff]
        %v386 = vld [vmem:[%s313 + $0x68] sm:$0xff]
        %v387 = vld [vmem:[%s313 + $0x70] sm:$0xff]
        %v388 = vld [vmem:[%s313 + $0x78] sm:$0xff]
        %v389 = vld [vmem:[%s276] sm:$0xf]
        %v390 = vld [vmem:[%s276 + $0x4] sm:$0xf]
        %v391 = vld [vmem:[%s276 + $0x8] sm:$0xf]
        %v392 = vld [vmem:[%s276 + $0xc] sm:$0xf]
        %v393 = vld [vmem:[%s276 + $0x10] sm:$0xf]
        %v394 = vld [vmem:[%s276 + $0x14] sm:$0xf]
        %v395 = vld [vmem:[%s276 + $0x18] sm:$0xf]
        %v396 = vld [vmem:[%s276 + $0x1c] sm:$0xf]
        %v397 = vld [vmem:[%s276 + $0x20] sm:$0xf]
        %v398 = vld [vmem:[%s276 + $0x24] sm:$0xf]
        %v399 = vld [vmem:[%s276 + $0x28] sm:$0xf]
        %v400 = vld [vmem:[%s276 + $0x2c] sm:$0xf]
        %v401 = vld [vmem:[%s276 + $0x30] sm:$0xf]
        %v402 = vld [vmem:[%s276 + $0x34] sm:$0xf]
        %v403 = vld [vmem:[%s276 + $0x38] sm:$0xf]
        %v404 = vld [vmem:[%s276 + $0x3c] sm:$0xf]
        %v421 = vunpack.c.l.b16 %v389
        %v422 = vunpack.c.l.b16 %v390
        %v423 = vunpack.c.l.b16 %v391
        %v424 = vunpack.c.l.b16 %v392
        %v425 = vunpack.c.l.b16 %v393
        %v426 = vunpack.c.l.b16 %v394
        %v427 = vunpack.c.l.b16 %v395
        %v428 = vunpack.c.l.b16 %v396
        %v429 = vunpack.c.l.b16 %v397
        %v430 = vunpack.c.l.b16 %v398
        %v431 = vunpack.c.l.b16 %v399
        %v432 = vunpack.c.l.b16 %v400
        %v433 = vunpack.c.l.b16 %v401
        %v434 = vunpack.c.l.b16 %v402
        %v435 = vunpack.c.l.b16 %v403
        %v436 = vunpack.c.l.b16 %v404
        %v437 = vpack.c.b16 %v422, %v421
        %v438 = vpack.c.b16 %v424, %v423
        %v439 = vpack.c.b16 %v426, %v425
        %v440 = vpack.c.b16 %v428, %v427
        %v441 = vpack.c.b16 %v430, %v429
        %v442 = vpack.c.b16 %v432, %v431
        %v443 = vpack.c.b16 %v434, %v433
        %v444 = vpack.c.b16 %v436, %v435
        %v469 = vunpack.c.l.b16 %v357
        %v470 = vunpack.c.l.b16 %v358
        %v471 = vunpack.c.l.b16 %v359
        %v472 = vunpack.c.l.b16 %v360
        %v473 = vunpack.c.l.b16 %v361
        %v474 = vunpack.c.l.b16 %v362
        %v475 = vunpack.c.l.b16 %v363
        %v476 = vunpack.c.l.b16 %v364
        %v477 = vunpack.c.l.b16 %v365
        %v478 = vunpack.c.l.b16 %v366
        %v479 = vunpack.c.l.b16 %v367
        %v480 = vunpack.c.l.b16 %v368
        %v481 = vunpack.c.l.b16 %v369
        %v482 = vunpack.c.l.b16 %v370
        %v483 = vunpack.c.l.b16 %v371
        %v484 = vunpack.c.l.b16 %v372
        %v485 = vpack.c.b16 %v470, %v469
        %v486 = vpack.c.b16 %v472, %v471
        %v487 = vpack.c.b16 %v474, %v473
        %v488 = vpack.c.b16 %v476, %v475
        %v489 = vpack.c.b16 %v478, %v477
        %v490 = vpack.c.b16 %v480, %v479
        %v491 = vpack.c.b16 %v482, %v481
        %v492 = vpack.c.b16 %v484, %v483
        %501 = vmatprep.subr.bf16.mxu0 0
        %502 = vmatpush1.bf16.msra.mxu0 %v492
        %503 = vmatprep.subr.bf16.mxu0 0
        %504 = vmatpush1.bf16.msra.mxu0 %v491
        %505 = vmatprep.subr.bf16.mxu0 0
        %506 = vmatpush1.bf16.msra.mxu0 %v490
        %507 = vmatprep.subr.bf16.mxu0 0
        %508 = vmatpush1.bf16.msra.mxu0 %v489
        %509 = vmatprep.subr.bf16.mxu0 0
        %510 = vmatpush1.bf16.msra.mxu0 %v488
        %511 = vmatprep.subr.bf16.mxu0 0
        %512 = vmatpush1.bf16.msra.mxu0 %v487
        %513 = vmatprep.subr.bf16.mxu0 0
        %514 = vmatpush1.bf16.msra.mxu0 %v486
        %515 = vmatprep.subr.bf16.mxu0 0
        %516 = vmatpush1.bf16.msra.mxu0 %v485
        %517 = vmatprep.subr.bf16.mxu0 0
        %518 = vmatpush2.bf16.msra.mxu0 0
        %519 = vmatprep.subr.bf16.mxu0 0
        %520 = vmatpush2.bf16.msra.mxu0 0
        %521 = vmatprep.subr.bf16.mxu0 0
        %522 = vmatpush2.bf16.msra.mxu0 0
        %523 = vmatprep.subr.bf16.mxu0 0
        %524 = vmatpush2.bf16.msra.mxu0 0
        %525 = vmatprep.subr.bf16.mxu0 0
        %526 = vmatpush2.bf16.msra.mxu0 0
        %527 = vmatprep.subr.bf16.mxu0 0
        %528 = vmatpush2.bf16.msra.mxu0 0
        %529 = vmatprep.subr.bf16.mxu0 0
        %530 = vmatpush2.bf16.msra.mxu0 0
        %531 = vmatprep.subr.bf16.mxu0 0
        %532 = vmatpush2.bf16.msra.mxu0 0
        %533 = vmatprep.mubr.bf16.mxu0 0
        %534 = vmatmul.mubr.bf16.gmra.mxu0 %v437
        %v535 = vpop.f32.mrf.mxu0
        %v536 = vadd.f32 0.0, %v535
        %v537 = vpop.f32.mrf.mxu0
        %v538 = vpop.f32.mrf.mxu0
        %v539 = vadd.f32 0.0, %v538
        %v540 = vpop.f32.mrf.mxu0
        %541 = vmatprep.mubr.bf16.mxu0 0
        %542 = vmatmul.mubr.bf16.gmra.mxu0 %v438
        %v543 = vpop.f32.mrf.mxu0
        %v544 = vadd.f32 0.0, %v543
        %v545 = vpop.f32.mrf.mxu0
        %v546 = vpop.f32.mrf.mxu0
        %v547 = vadd.f32 0.0, %v546
        %v548 = vpop.f32.mrf.mxu0
        %549 = vmatprep.mubr.bf16.mxu0 0
        %550 = vmatmul.mubr.bf16.gmra.mxu0 %v439
        %v551 = vpop.f32.mrf.mxu0
        %v552 = vadd.f32 0.0, %v551
        %v553 = vpop.f32.mrf.mxu0
        %v554 = vpop.f32.mrf.mxu0
        %v555 = vadd.f32 0.0, %v554
        %v556 = vpop.f32.mrf.mxu0
        %557 = vmatprep.mubr.bf16.mxu0 0
        %558 = vmatmul.mubr.bf16.gmra.mxu0 %v440
        %v559 = vpop.f32.mrf.mxu0
        %v560 = vadd.f32 0.0, %v559
        %v561 = vpop.f32.mrf.mxu0
        %v562 = vpop.f32.mrf.mxu0
        %v563 = vadd.f32 0.0, %v562
        %v564 = vpop.f32.mrf.mxu0
        %565 = vmatprep.mubr.bf16.mxu0 0
        %566 = vmatmul.mubr.bf16.gmra.mxu0 %v441
        %v567 = vpop.f32.mrf.mxu0
        %v568 = vadd.f32 0.0, %v567
        %v569 = vpop.f32.mrf.mxu0
        %v570 = vpop.f32.mrf.mxu0
        %v571 = vadd.f32 0.0, %v570
        %v572 = vpop.f32.mrf.mxu0
        %573 = vmatprep.mubr.bf16.mxu0 0
        %574 = vmatmul.mubr.bf16.gmra.mxu0 %v442
        %v575 = vpop.f32.mrf.mxu0
        %v576 = vadd.f32 0.0, %v575
        %v577 = vpop.f32.mrf.mxu0
        %v578 = vpop.f32.mrf.mxu0
        %v579 = vadd.f32 0.0, %v578
        %v580 = vpop.f32.mrf.mxu0
        %581 = vmatprep.mubr.bf16.mxu0 0
        %582 = vmatmul.mubr.bf16.gmra.mxu0 %v443
        %v583 = vpop.f32.mrf.mxu0
        %v584 = vadd.f32 0.0, %v583
        %v585 = vpop.f32.mrf.mxu0
        %v586 = vpop.f32.mrf.mxu0
        %v587 = vadd.f32 0.0, %v586
        %v588 = vpop.f32.mrf.mxu0
        %589 = vmatprep.mubr.bf16.mxu0 0
        %590 = vmatmul.mubr.bf16.gmra.mxu0 %v444
        %v591 = vpop.f32.mrf.mxu0
        %v592 = vadd.f32 0.0, %v591
        %v593 = vpop.f32.mrf.mxu0
        %v594 = vpop.f32.mrf.mxu0
        %v595 = vadd.f32 0.0, %v594
        %v596 = vpop.f32.mrf.mxu0
        %597 = vdwg.mxu0
        %v598 = vadd.f32 %v373, %v536
        %v599 = vadd.f32 %v374, %v539
        %v600 = vadd.f32 %v375, %v544
        %v601 = vadd.f32 %v376, %v547
        %v602 = vadd.f32 %v377, %v552
        %v603 = vadd.f32 %v378, %v555
        %v604 = vadd.f32 %v379, %v560
        %v605 = vadd.f32 %v380, %v563
        %v606 = vadd.f32 %v381, %v568
        %v607 = vadd.f32 %v382, %v571
        %v608 = vadd.f32 %v383, %v576
        %v609 = vadd.f32 %v384, %v579
        %v610 = vadd.f32 %v385, %v584
        %v611 = vadd.f32 %v386, %v587
        %v612 = vadd.f32 %v387, %v592
        %v613 = vadd.f32 %v388, %v595
        %614 = vst [vmem:[%s313] sm:$0xff] %v598
        %615 = vst [vmem:[%s313 + $0x8] sm:$0xff] %v599
        %616 = vst [vmem:[%s313 + $0x10] sm:$0xff] %v600
        %617 = vst [vmem:[%s313 + $0x18] sm:$0xff] %v601
        %618 = vst [vmem:[%s313 + $0x20] sm:$0xff] %v602
        %619 = vst [vmem:[%s313 + $0x28] sm:$0xff] %v603
        %620 = vst [vmem:[%s313 + $0x30] sm:$0xff] %v604
        %621 = vst [vmem:[%s313 + $0x38] sm:$0xff] %v605
        %622 = vst [vmem:[%s313 + $0x40] sm:$0xff] %v606
        %623 = vst [vmem:[%s313 + $0x48] sm:$0xff] %v607
        %624 = vst [vmem:[%s313 + $0x50] sm:$0xff] %v608
        %625 = vst [vmem:[%s313 + $0x58] sm:$0xff] %v609
        %626 = vst [vmem:[%s313 + $0x60] sm:$0xff] %v610
        %627 = vst [vmem:[%s313 + $0x68] sm:$0xff] %v611
        %628 = vst [vmem:[%s313 + $0x70] sm:$0xff] %v612
        %629 = vst [vmem:[%s313 + $0x78] sm:$0xff] %v613
        %s630 = smul.u32 16, %s18
        %p631 = scmp.lt.s32.totalorder %s630, 31
        %s632 = scalar_select %p631, %s630, 31
        %s633 = smul.addr %s632, 8
        %s634 = scalar_lea.vmem %s3, %s633
        // Predicated region
        $region78: #{sage_forward.3} parent=68 // pred_check
          %p635 = pneg %p119
        $region79: #{sage_forward.3} parent=68 // pred_check_branch
          %637 = sbr.rel (%p635) target = $region81
        $region80: #{sage_forward.3} parent=68 // pred_region
          %s638 = smul.u32 16, %s18
        $region81: #{sage_forward.3} parent=68 // pred_fallthru
          _
      $region69: #{sage_forward.3} parent=5 // pred_fallthru
        _
      %p639 = scmp.le.s32.totalorder 2, %s9
      // Predicated region
      $region82: #{sage_forward.3} parent=5 // pred_check
        %p640 = pneg %p639
      $region83: #{sage_forward.3} parent=5 // pred_check_branch
        %642 = sbr.rel (%p640) target = $region85
      $region84: #{sage_forward.3} parent=5 // pred_region
        %s643 = ssub.s32 %s9, 2
        // Predicated region
        $region86: #{sage_forward.3} parent=84 // pred_check
          %p644 = pneg %p125
        $region87: #{sage_forward.3} parent=84 // pred_check_branch
          %646 = sbr.rel (%p644) target = $region89
        $region88: #{sage_forward.3} parent=84 // pred_region
          %s647 = smul.u32 16, %s20
          %p648 = scmp.lt.s32.totalorder %s647, 31
          %s649 = scalar_select %p648, %s647, 31
          %s650 = smul.addr %s649, 8
          %s651 = scalar_lea.vmem %s3, %s650
        $region89: #{sage_forward.3} parent=84 // pred_fallthru
          _
      $region85: #{sage_forward.3} parent=5 // pred_fallthru
        _
    $region6: #{sage_forward.3} parent=1 // loop_footer
      %s13 = sadd.s32 1, %s9
    $region7: #{sage_forward.3} parent=1 // loop_footer_branch
      %8 = sbr.rel target = $region3
    $region8: #{sage_forward.3} parent=1 // loop_exit
      _

// kernel: sage_forward.2
$region0: #{sage_forward.2}
  #allocation0 [shape = 'u32[]', space=smem, size = 0x4, offset = 0x4, fixed_abs, tag = 'smem constant byte address 0x4 - core index']
  #allocation1 [shape = 'u32[144,128]{1,0:T(1,128)}', space=vmem, size = 0x12000, scoped, tag = 'internal scratch']
  #allocation2 [shape = 'f32[128,128]{1,0:T(8,128)}', space=vmem, size = 0x10000, scoped, tag = 'scratch operand']
  %s0 = inlined_call_operand.vmem [shape: bf16[256,256], index: 0, kind: input, shape index: {}]
  %s1 = inlined_call_operand.vmem [shape: bf16[256,128], index: 1, kind: input, shape index: {}, may-alias: {1,2}]
  %s2 = inlined_call_operand.vmem [shape: bf16[256,128], index: 2, kind: input, shape index: {}, may-alias: {1,2}]
  %s3 = inlined_call_operand.vmem [shape: bf16[128,128], index: 3, kind: input, shape index: {}]
  %s4 = inlined_call_operand.vmem [shape: bf16[128,128], index: 4, kind: input, shape index: {}]
  %s5 = inlined_call_operand.vmem [shape: f32[1,128], index: 5, kind: input, shape index: {}]
  %s6 = inlined_call_operand.vmem [shape: bf16[128,128], index: 6, kind: input, shape index: {}]
  %s7 = inlined_call_operand.vmem [shape: bf16[128,128], index: 7, kind: input, shape index: {}]
  %s8 = inlined_call_operand.vmem [shape: f32[1,128], index: 8, kind: input, shape index: {}]
  %s9 = inlined_call_operand.vmem [shape: f32[256,128], index: 9, kind: output, shape index: {0}]
  %s10 = inlined_call_operand.vmem [shape: bf16[256,128], index: 10, kind: output, shape index: {1}]
  %11 = xla_tuple %s9, %s10
  %s12 = sld [smem:[#allocation0]]
  $region126: #{sage_forward.2} parent=0
    _
  %s14 = ssub.s32 1, %s12
  %s15 = scalar_select 0, %s14, %s12
  $region1: #{sage_forward.2} parent=0
    #allocation3 [shape = 'u8[65536]{0}', space=vmem, size = 0x10000, scoped, tag = 'input window, operand 0']
    loop: start=0, step=1, limit=6
    $region2: #{sage_forward.2} parent=1 // loop_pre_header
      _
    $region3: #{sage_forward.2} parent=1 // loop_header
      %s17 = sphi 0, %s21
      %p18 = scmp.ge.s32.totalorder %s17, 6
      %s24 = sphi 0, %s36
      %s25 = sphi 0, %s32
      %s26 = sphi 0, %s24
      %s27 = sphi 0, %s25
      %s28 = sphi 0, %s26
      %s29 = sphi 0, %s27
      %s41 = sphi 0, %s43
      %s44 = sphi 0, %s41
      %s45 = sphi 0, %s44
      %s61 = sphi 0, %s45
      %s67 = sphi 0, %s69
      %s70 = sphi 0, %s67
      %s71 = sphi 0, %s70
      %s87 = sphi 0, %s71
      %s91 = sphi 0, %s91
      %s93 = sphi 0, %s91
      %s94 = sphi 0, %s93
      %s108 = sphi 0, %s94
      %s112 = sphi 0, %s112
      %s114 = sphi 0, %s112
      %s115 = sphi 0, %s114
      %s129 = sphi 0, %s115
      %s133 = sphi 0, %s133
      %s135 = sphi 0, %s133
      %s136 = sphi 0, %s135
      %s150 = sphi 0, %s136
      %s154 = sphi 0, %s154
      %s156 = sphi 0, %s154
      %s157 = sphi 0, %s156
      %s171 = sphi 0, %s157
      %s175 = sphi 0, %s175
      %s177 = sphi 0, %s175
      %s178 = sphi 0, %s177
      %s192 = sphi 0, %s178
      %s196 = sphi 0, %s196
      %s198 = sphi 0, %s196
      %s199 = sphi 0, %s198
      %s213 = sphi 0, %s199
      %s217 = sphi 0, %s217
      %s219 = sphi 0, %s217
      %s220 = sphi 0, %s219
      %s234 = sphi 0, %s220
      %s240 = sphi 0, %s242
      %s243 = sphi 0, %s240
      %s244 = sphi 0, %s243
      %s260 = sphi 0, %s244
      %s266 = sphi 0, %s268
      %s269 = sphi 0, %s266
      %s270 = sphi 0, %s269
      %s286 = sphi 0, %s270
    $region4: #{sage_forward.2} parent=1 // loop_header_branch
      %20 = sbr.rel (%p18) target = $region8
    $region5: #{sage_forward.2} parent=1 // loop_body
      %s22 = ssub.s32 %s17, 1
      %s23 = ssub.s32 %s17, 2
      %s30 = sadd.s32 1, %s25
      %p31 = scmp.ge.s32.totalorder %s30, 2
      %s32 = scalar_select %p31, 0, %s30
      %s33 = sadd.s32 1, %s24
      %s34 = scalar_select %p31, %s33, %s24
      %p35 = scmp.ge.s32.totalorder %s34, 2
      %s36 = scalar_select %p35, 0, %s34
      %s37 = ssub.s32 %s24, %s36
      %s38 = ssub.s32 %s25, %s32
      %s39 = sor.u32 %s37, %s38
      %p40 = scmp.eq.s32.totalorder %s39, 0
      %s42 = sadd.s32 %s41, 1
      %s43 = scalar_select %p40, %s41, %s42
      %p46 = pneg %p40
      %p47 = scmp.eq.s32.totalorder %s17, 3
      %p48 = por %p46, %p47
      %p49 = scmp.ne.s32.totalorder %s41, %s44
      %p50 = scmp.eq.s32.totalorder %s17, 0
      %p51 = por %p49, %p50
      %p52 = scmp.ne.s32.totalorder %s41, %s44
      %p53 = scmp.eq.s32.totalorder %s22, 3
      %p54 = por %p52, %p53
      %p55 = scmp.ne.s32.totalorder %s44, %s45
      %p56 = scmp.eq.s32.totalorder %s22, 0
      %p57 = por %p55, %p56
      %p58 = scmp.ne.s32.totalorder %s44, %s45
      %p59 = scmp.eq.s32.totalorder %s23, 3
      %p60 = por %p58, %p59
      %p62 = scmp.ne.s32.totalorder %s45, %s61
      %p63 = scmp.eq.s32.totalorder %s23, 0
      %p64 = por %p62, %p63
      %s65 = ssub.s32 %s24, %s36
      %p66 = scmp.eq.s32.totalorder %s65, 0
      %s68 = sadd.s32 %s67, 1
      %s69 = scalar_select %p66, %s67, %s68
      %p72 = pneg %p66
      %p73 = scmp.eq.s32.totalorder %s17, 3
      %p74 = por %p72, %p73
      %p75 = scmp.ne.s32.totalorder %s67, %s70
      %p76 = scmp.eq.s32.totalorder %s17, 0
      %p77 = por %p75, %p76
      %p78 = scmp.ne.s32.totalorder %s67, %s70
      %p79 = scmp.eq.s32.totalorder %s22, 3
      %p80 = por %p78, %p79
      %p81 = scmp.ne.s32.totalorder %s70, %s71
      %p82 = scmp.eq.s32.totalorder %s22, 0
      %p83 = por %p81, %p82
      %p84 = scmp.ne.s32.totalorder %s70, %s71
      %p85 = scmp.eq.s32.totalorder %s23, 3
      %p86 = por %p84, %p85
      %p88 = scmp.ne.s32.totalorder %s71, %s87
      %p89 = scmp.eq.s32.totalorder %s23, 0
      %p90 = por %p88, %p89
      %s92 = sadd.s32 %s91, 1
      %p95 = scmp.eq.s32.totalorder %s17, 3
      %p96 = scmp.ne.s32.totalorder %s91, %s93
      %p97 = scmp.eq.s32.totalorder %s17, 0
      %p98 = por %p96, %p97
      %p99 = scmp.ne.s32.totalorder %s91, %s93
      %p100 = scmp.eq.s32.totalorder %s22, 3
      %p101 = por %p99, %p100
      %p102 = scmp.ne.s32.totalorder %s93, %s94
      %p103 = scmp.eq.s32.totalorder %s22, 0
      %p104 = por %p102, %p103
      %p105 = scmp.ne.s32.totalorder %s93, %s94
      %p106 = scmp.eq.s32.totalorder %s23, 3
      %p107 = por %p105, %p106
      %p109 = scmp.ne.s32.totalorder %s94, %s108
      %p110 = scmp.eq.s32.totalorder %s23, 0
      %p111 = por %p109, %p110
      %s113 = sadd.s32 %s112, 1
      %p116 = scmp.eq.s32.totalorder %s17, 3
      %p117 = scmp.ne.s32.totalorder %s112, %s114
      %p118 = scmp.eq.s32.totalorder %s17, 0
      %p119 = por %p117, %p118
      %p120 = scmp.ne.s32.totalorder %s112, %s114
      %p121 = scmp.eq.s32.totalorder %s22, 3
      %p122 = por %p120, %p121
      %p123 = scmp.ne.s32.totalorder %s114, %s115
      %p124 = scmp.eq.s32.totalorder %s22, 0
      %p125 = por %p123, %p124
      %p126 = scmp.ne.s32.totalorder %s114, %s115
      %p127 = scmp.eq.s32.totalorder %s23, 3
      %p128 = por %p126, %p127
      %p130 = scmp.ne.s32.totalorder %s115, %s129
      %p131 = scmp.eq.s32.totalorder %s23, 0
      %p132 = por %p130, %p131
      %s134 = sadd.s32 %s133, 1
      %p137 = scmp.eq.s32.totalorder %s17, 3
      %p138 = scmp.ne.s32.totalorder %s133, %s135
      %p139 = scmp.eq.s32.totalorder %s17, 0
      %p140 = por %p138, %p139
      %p141 = scmp.ne.s32.totalorder %s133, %s135
      %p142 = scmp.eq.s32.totalorder %s22, 3
      %p143 = por %p141, %p142
      %p144 = scmp.ne.s32.totalorder %s135, %s136
      %p145 = scmp.eq.s32.totalorder %s22, 0
      %p146 = por %p144, %p145
      %p147 = scmp.ne.s32.totalorder %s135, %s136
      %p148 = scmp.eq.s32.totalorder %s23, 3
      %p149 = por %p147, %p148
      %p151 = scmp.ne.s32.totalorder %s136, %s150
      %p152 = scmp.eq.s32.totalorder %s23, 0
      %p153 = por %p151, %p152
      %s155 = sadd.s32 %s154, 1
      %p158 = scmp.eq.s32.totalorder %s17, 3
      %p159 = scmp.ne.s32.totalorder %s154, %s156
      %p160 = scmp.eq.s32.totalorder %s17, 0
      %p161 = por %p159, %p160
      %p162 = scmp.ne.s32.totalorder %s154, %s156
      %p163 = scmp.eq.s32.totalorder %s22, 3
      %p164 = por %p162, %p163
      %p165 = scmp.ne.s32.totalorder %s156, %s157
      %p166 = scmp.eq.s32.totalorder %s22, 0
      %p167 = por %p165, %p166
      %p168 = scmp.ne.s32.totalorder %s156, %s157
      %p169 = scmp.eq.s32.totalorder %s23, 3
      %p170 = por %p168, %p169
      %p172 = scmp.ne.s32.totalorder %s157, %s171
      %p173 = scmp.eq.s32.totalorder %s23, 0
      %p174 = por %p172, %p173
      %s176 = sadd.s32 %s175, 1
      %p179 = scmp.eq.s32.totalorder %s17, 3
      %p180 = scmp.ne.s32.totalorder %s175, %s177
      %p181 = scmp.eq.s32.totalorder %s17, 0
      %p182 = por %p180, %p181
      %p183 = scmp.ne.s32.totalorder %s175, %s177
      %p184 = scmp.eq.s32.totalorder %s22, 3
      %p185 = por %p183, %p184
      %p186 = scmp.ne.s32.totalorder %s177, %s178
      %p187 = scmp.eq.s32.totalorder %s22, 0
      %p188 = por %p186, %p187
      %p189 = scmp.ne.s32.totalorder %s177, %s178
      %p190 = scmp.eq.s32.totalorder %s23, 3
      %p191 = por %p189, %p190
      %p193 = scmp.ne.s32.totalorder %s178, %s192
      %p194 = scmp.eq.s32.totalorder %s23, 0
      %p195 = por %p193, %p194
      %s197 = sadd.s32 %s196, 1
      %p200 = scmp.eq.s32.totalorder %s17, 3
      %p201 = scmp.ne.s32.totalorder %s196, %s198
      %p202 = scmp.eq.s32.totalorder %s17, 0
      %p203 = por %p201, %p202
      %p204 = scmp.ne.s32.totalorder %s196, %s198
      %p205 = scmp.eq.s32.totalorder %s22, 3
      %p206 = por %p204, %p205
      %p207 = scmp.ne.s32.totalorder %s198, %s199
      %p208 = scmp.eq.s32.totalorder %s22, 0
      %p209 = por %p207, %p208
      %p210 = scmp.ne.s32.totalorder %s198, %s199
      %p211 = scmp.eq.s32.totalorder %s23, 3
      %p212 = por %p210, %p211
      %p214 = scmp.ne.s32.totalorder %s199, %s213
      %p215 = scmp.eq.s32.totalorder %s23, 0
      %p216 = por %p214, %p215
      %s218 = sadd.s32 %s217, 1
      %p221 = scmp.eq.s32.totalorder %s17, 3
      %p222 = scmp.ne.s32.totalorder %s217, %s219
      %p223 = scmp.eq.s32.totalorder %s17, 0
      %p224 = por %p222, %p223
      %p225 = scmp.ne.s32.totalorder %s217, %s219
      %p226 = scmp.eq.s32.totalorder %s22, 3
      %p227 = por %p225, %p226
      %p228 = scmp.ne.s32.totalorder %s219, %s220
      %p229 = scmp.eq.s32.totalorder %s22, 0
      %p230 = por %p228, %p229
      %p231 = scmp.ne.s32.totalorder %s219, %s220
      %p232 = scmp.eq.s32.totalorder %s23, 3
      %p233 = por %p231, %p232
      %p235 = scmp.ne.s32.totalorder %s220, %s234
      %p236 = scmp.eq.s32.totalorder %s23, 0
      %p237 = por %p235, %p236
      %s238 = ssub.s32 %s24, %s36
      %p239 = scmp.eq.s32.totalorder %s238, 0
      %s241 = sadd.s32 %s240, 1
      %s242 = scalar_select %p239, %s240, %s241
      %p245 = pneg %p239
      %p246 = scmp.eq.s32.totalorder %s17, 3
      %p247 = por %p245, %p246
      %p248 = scmp.ne.s32.totalorder %s240, %s243
      %p249 = scmp.eq.s32.totalorder %s17, 0
      %p250 = por %p248, %p249
      %p251 = scmp.ne.s32.totalorder %s240, %s243
      %p252 = scmp.eq.s32.totalorder %s22, 3
      %p253 = por %p251, %p252
      %p254 = scmp.ne.s32.totalorder %s243, %s244
      %p255 = scmp.eq.s32.totalorder %s22, 0
      %p256 = por %p254, %p255
      %p257 = scmp.ne.s32.totalorder %s243, %s244
      %p258 = scmp.eq.s32.totalorder %s23, 3
      %p259 = por %p257, %p258
      %p261 = scmp.ne.s32.totalorder %s244, %s260
      %p262 = scmp.eq.s32.totalorder %s23, 0
      %p263 = por %p261, %p262
      %s264 = ssub.s32 %s24, %s36
      %p265 = scmp.eq.s32.totalorder %s264, 0
      %s267 = sadd.s32 %s266, 1
      %s268 = scalar_select %p265, %s266, %s267
      %p271 = pneg %p265
      %p272 = scmp.eq.s32.totalorder %s17, 3
      %p273 = por %p271, %p272
      %p274 = scmp.ne.s32.totalorder %s266, %s269
      %p275 = scmp.eq.s32.totalorder %s17, 0
      %p276 = por %p274, %p275
      %p277 = scmp.ne.s32.totalorder %s266, %s269
      %p278 = scmp.eq.s32.totalorder %s22, 3
      %p279 = por %p277, %p278
      %p280 = scmp.ne.s32.totalorder %s269, %s270
      %p281 = scmp.eq.s32.totalorder %s22, 0
      %p282 = por %p280, %p281
      %p283 = scmp.ne.s32.totalorder %s269, %s270
      %p284 = scmp.eq.s32.totalorder %s23, 3
      %p285 = por %p283, %p284
      %p287 = scmp.ne.s32.totalorder %s270, %s286
      %p288 = scmp.eq.s32.totalorder %s23, 0
      %p289 = por %p287, %p288
      %p290 = scmp.le.s32.totalorder 1, %s17
      %p291 = scmp.lt.s32.totalorder %s17, 5
      %p292 = pnand %p290, %p291
      %p293 = pneg %p292
      // Predicated region
      $region9: #{sage_forward.2} parent=5 // pred_check
        _
      $region10: #{sage_forward.2} parent=5 // pred_check_branch
        %295 = sbr.rel (%p292) target = $region12
      $region11: #{sage_forward.2} parent=5 // pred_region
        %s296 = ssub.s32 %s17, 1
        // Predicated region
        $region13: #{sage_forward.2} parent=11 // pred_check
          %p297 = pneg %p104
        $region14: #{sage_forward.2} parent=11 // pred_check_branch
          %299 = sbr.rel (%p297) target = $region16
        $region15: #{sage_forward.2} parent=11 // pred_region
          _
        $region16: #{sage_forward.2} parent=11 // pred_fallthru
          _
        // Predicated region
        $region17: #{sage_forward.2} parent=11 // pred_check
          %p300 = pneg %p125
        $region18: #{sage_forward.2} parent=11 // pred_check_branch
          %302 = sbr.rel (%p300) target = $region20
        $region19: #{sage_forward.2} parent=11 // pred_region
          _
        $region20: #{sage_forward.2} parent=11 // pred_fallthru
          _
        // Predicated region
        $region21: #{sage_forward.2} parent=11 // pred_check
          %p303 = pneg %p146
        $region22: #{sage_forward.2} parent=11 // pred_check_branch
          %305 = sbr.rel (%p303) target = $region24
        $region23: #{sage_forward.2} parent=11 // pred_region
          _
        $region24: #{sage_forward.2} parent=11 // pred_fallthru
          _
        // Predicated region
        $region25: #{sage_forward.2} parent=11 // pred_check
          %p306 = pneg %p167
        $region26: #{sage_forward.2} parent=11 // pred_check_branch
          %308 = sbr.rel (%p306) target = $region28
        $region27: #{sage_forward.2} parent=11 // pred_region
          _
        $region28: #{sage_forward.2} parent=11 // pred_fallthru
          _
        // Predicated region
        $region29: #{sage_forward.2} parent=11 // pred_check
          %p309 = pneg %p188
        $region30: #{sage_forward.2} parent=11 // pred_check_branch
          %311 = sbr.rel (%p309) target = $region32
        $region31: #{sage_forward.2} parent=11 // pred_region
          _
        $region32: #{sage_forward.2} parent=11 // pred_fallthru
          _
        // Predicated region
        $region33: #{sage_forward.2} parent=11 // pred_check
          %p312 = pneg %p209
        $region34: #{sage_forward.2} parent=11 // pred_check_branch
          %314 = sbr.rel (%p312) target = $region36
        $region35: #{sage_forward.2} parent=11 // pred_region
          _
        $region36: #{sage_forward.2} parent=11 // pred_fallthru
          _
        // Predicated region
        $region37: #{sage_forward.2} parent=11 // pred_check
          %p315 = pneg %p230
        $region38: #{sage_forward.2} parent=11 // pred_check_branch
          %317 = sbr.rel (%p315) target = $region40
        $region39: #{sage_forward.2} parent=11 // pred_region
          _
        $region40: #{sage_forward.2} parent=11 // pred_fallthru
          _
      $region12: #{sage_forward.2} parent=5 // pred_fallthru
        _
      %p318 = scmp.lt.s32.totalorder %s17, 4
      // Predicated region
      $region41: #{sage_forward.2} parent=5 // pred_check
        %p319 = pneg %p318
      $region42: #{sage_forward.2} parent=5 // pred_check_branch
        %321 = sbr.rel (%p319) target = $region44
      $region43: #{sage_forward.2} parent=5 // pred_region
        // Predicated region
        $region45: #{sage_forward.2} parent=43 // pred_check
          %p322 = pneg %p51
        $region46: #{sage_forward.2} parent=43 // pred_check_branch
          %324 = sbr.rel (%p322) target = $region48
        $region47: #{sage_forward.2} parent=43 // pred_region
          %s325 = sand.u32 %s41, 1
          %s326 = sand.u32 %s41, 1
          %s327 = smul.addr %s326, 64
          %s328 = scalar_lea.vmem [#allocation3], %s327
          %s329 = smul.u32 16, %s24
          %s330 = smul.addr %s329, 2
          %s331 = sadd.s32 %s25, %s330
          %s332 = smul.addr %s331, 4
          %s333 = scalar_lea.vmem %s0, %s332
          // Predicated region
          $region49: #{sage_forward.2} parent=47 // pred_check
            _
          $region50: #{sage_forward.2} parent=47 // pred_check_branch
            %335 = sbr.rel (0) target = $region52
          $region51: #{sage_forward.2} parent=47 // pred_region
            // Predicated region
            $region53: #{sage_forward.2} parent=51 // pred_check
              _
            $region54: #{sage_forward.2} parent=51 // pred_check_branch
              %337 = sbr.rel target = $region56
            $region55: #{sage_forward.2} parent=51 // pred_region
              // Predicated region
              $region68: #{sage_forward.2} parent=55 // pred_check
                _
              $region69: #{sage_forward.2} parent=55 // pred_check_branch
                %383 = sbr.rel (0) target = $region71
              $region70: #{sage_forward.2} parent=55 // pred_region
                loop: start=0, step=1, limit=1
                $region72: #{sage_forward.2} parent=70 // loop_pre_header
                  _
                $region73: #{sage_forward.2} parent=70 // loop_header
                  %s385 = sphi 0, %s389
                  %p386 = scmp.ge.s32.totalorder %s385, 1
                  %s390 = sphi %s333, %s333
                  %s391 = sphi %s328, %s328
                $region74: #{sage_forward.2} parent=70 // loop_header_branch
                  %388 = sbr.rel (%p386) target = $region78
                $region75: #{sage_forward.2} parent=70 // loop_body
                  _
                $region76: #{sage_forward.2} parent=70 // loop_footer
                  %s389 = sadd.s32 1, %s385
                $region77: #{sage_forward.2} parent=70 // loop_footer_branch
                  %384 = sbr.rel target = $region73
                $region78: #{sage_forward.2} parent=70 // loop_exit
                  _
                %s393 = ssub.s32 16, 1
                loop: start=0, step=1, limit=1
                $region79: #{sage_forward.2} parent=70 // loop_pre_header
                  _
                $region80: #{sage_forward.2} parent=70 // loop_header
                  %s395 = sphi 0, %s399
                  %p396 = scmp.ge.s32.totalorder %s395, 1
                  %s400 = sphi %s333, %s333
                  %s401 = sphi %s328, %s328
                $region81: #{sage_forward.2} parent=70 // loop_header_branch
                  %398 = sbr.rel (%p396) target = $region85
                $region82: #{sage_forward.2} parent=70 // loop_body
                  %v402 = vld [vmem:[%s400] sm:%s393]
                  %403 = vst [vmem:[%s401] sm:%s393] %v402
                  %v404 = vld [vmem:[%s400 + $0x8] sm:%s393]
                  %405 = vst [vmem:[%s401 + $0x4] sm:%s393] %v404
                  %v406 = vld [vmem:[%s400 + $0x10] sm:%s393]
                  %407 = vst [vmem:[%s401 + $0x8] sm:%s393] %v406
                  %v408 = vld [vmem:[%s400 + $0x18] sm:%s393]
                  %409 = vst [vmem:[%s401 + $0xc] sm:%s393] %v408
                  %v410 = vld [vmem:[%s400 + $0x20] sm:%s393]
                  %411 = vst [vmem:[%s401 + $0x10] sm:%s393] %v410
                  %v412 = vld [vmem:[%s400 + $0x28] sm:%s393]
                  %413 = vst [vmem:[%s401 + $0x14] sm:%s393] %v412
                  %v414 = vld [vmem:[%s400 + $0x30] sm:%s393]
                  %415 = vst [vmem:[%s401 + $0x18] sm:%s393] %v414
                  %v416 = vld [vmem:[%s400 + $0x38] sm:%s393]
                  %417 = vst [vmem:[%s401 + $0x1c] sm:%s393] %v416
                  %v418 = vld [vmem:[%s400 + $0x40] sm:%s393]
                  %419 = vst [vmem:[%s401 + $0x20] sm:%s393] %v418
                  %v420 = vld [vmem:[%s400 + $0x48] sm:%s393]
                  %421 = vst [vmem:[%s401 + $0x24] sm:%s393] %v420
                  %v422 = vld [vmem:[%s400 + $0x50] sm:%s393]
                  %423 = vst [vmem:[%s401 + $0x28] sm:%s393] %v422
                  %v424 = vld [vmem:[%s400 + $0x58] sm:%s393]
                  %425 = vst [vmem:[%s401 + $0x2c] sm:%s393] %v424
                  %v426 = vld [vmem:[%s400 + $0x60] sm:%s393]
                  %427 = vst [vmem:[%s401 + $0x30] sm:%s393] %v426
                  %v428 = vld [vmem:[%s400 + $0x68] sm:%s393]
                  %429 = vst [vmem:[%s401 + $0x34] sm:%s393] %v428
                  %v430 = vld [vmem:[%s400 + $0x70] sm:%s393]
                  %431 = vst [vmem:[%s401 + $0x38] sm:%s393] %v430
                  %v432 = vld [vmem:[%s400 + $0x78] sm:%s393]
                  %433 = vst [vmem:[%s401 + $0x3c] sm:%s393] %v432
                $region83: #{sage_forward.2} parent=70 // loop_footer
                  %s399 = sadd.s32 1, %s395
                $region84: #{sage_forward.2} parent=70 // loop_footer_branch
                  %394 = sbr.rel target = $region80
                $region85: #{sage_forward.2} parent=70 // loop_exit
                  _
              $region71: #{sage_forward.2} parent=55 // pred_fallthru
                _
            $region56: #{sage_forward.2} parent=51 // pred_fallthru
              _
            // Predicated region
            $region57: #{sage_forward.2} parent=51 // pred_check
              _
            $region58: #{sage_forward.2} parent=51 // pred_check_branch
              %339 = sbr.rel (0) target = $region60
            $region59: #{sage_forward.2} parent=51 // pred_region
              %s341 = ssub.s32 16, 1
              loop: start=0, step=1, limit=1
              $region61: #{sage_forward.2} parent=59 // loop_pre_header
                _
              $region62: #{sage_forward.2} parent=59 // loop_header
                %s343 = sphi 0, %s347
                %p344 = scmp.ge.s32.totalorder %s343, 1
                %s348 = sphi %s333, %s333
                %s349 = sphi %s328, %s328
              $region63: #{sage_forward.2} parent=59 // loop_header_branch
                %346 = sbr.rel (%p344) target = $region67
              $region64: #{sage_forward.2} parent=59 // loop_body
                %v350 = vld [vmem:[%s348] sm:%s341]
                %351 = vst [vmem:[%s349] sm:%s341] %v350
                %v352 = vld [vmem:[%s348 + $0x8] sm:%s341]
                %353 = vst [vmem:[%s349 + $0x4] sm:%s341] %v352
                %v354 = vld [vmem:[%s348 + $0x10] sm:%s341]
                %355 = vst [vmem:[%s349 + $0x8] sm:%s341] %v354
                %v356 = vld [vmem:[%s348 + $0x18] sm:%s341]
                %357 = vst [vmem:[%s349 + $0xc] sm:%s341] %v356
                %v358 = vld [vmem:[%s348 + $0x20] sm:%s341]
                %359 = vst [vmem:[%s349 + $0x10] sm:%s341] %v358
                %v360 = vld [vmem:[%s348 + $0x28] sm:%s341]
                %361 = vst [vmem:[%s349 + $0x14] sm:%s341] %v360
                %v362 = vld [vmem:[%s348 + $0x30] sm:%s341]
                %363 = vst [vmem:[%s349 + $0x18] sm:%s341] %v362
                %v364 = vld [vmem:[%s348 + $0x38] sm:%s341]
                %365 = vst [vmem:[%s349 + $0x1c] sm:%s341] %v364
                %v366 = vld [vmem:[%s348 + $0x40] sm:%s341]
                %367 = vst [vmem:[%s349 + $0x20] sm:%s341] %v366
                %v368 = vld [vmem:[%s348 + $0x48] sm:%s341]
                %369 = vst [vmem:[%s349 + $0x24] sm:%s341] %v368
                %v370 = vld [vmem:[%s348 + $0x50] sm:%s341]
                %371 = vst [vmem:[%s349 + $0x28] sm:%s341] %v370
                %v372 = vld [vmem:[%s348 + $0x58] sm:%s341]
                %373 = vst [vmem:[%s349 + $0x2c] sm:%s341] %v372
                %v374 = vld [vmem:[%s348 + $0x60] sm:%s341]
                %375 = vst [vmem:[%s349 + $0x30] sm:%s341] %v374
                %v376 = vld [vmem:[%s348 + $0x68] sm:%s341]
                %377 = vst [vmem:[%s349 + $0x34] sm:%s341] %v376
                %v378 = vld [vmem:[%s348 + $0x70] sm:%s341]
                %379 = vst [vmem:[%s349 + $0x38] sm:%s341] %v378
                %v380 = vld [vmem:[%s348 + $0x78] sm:%s341]
                %381 = vst [vmem:[%s349 + $0x3c] sm:%s341] %v380
              $region65: #{sage_forward.2} parent=59 // loop_footer
                %s347 = sadd.s32 1, %s343
              $region66: #{sage_forward.2} parent=59 // loop_footer_branch
                %342 = sbr.rel target = $region62
              $region67: #{sage_forward.2} parent=59 // loop_exit
                _
            $region60: #{sage_forward.2} parent=51 // pred_fallthru
              _
          $region52: #{sage_forward.2} parent=47 // pred_fallthru
            _
          %434 = vnop
        $region48: #{sage_forward.2} parent=43 // pred_fallthru
          _
        // Predicated region
        $region86: #{sage_forward.2} parent=43 // pred_check
          %p435 = pneg %p77
        $region87: #{sage_forward.2} parent=43 // pred_check_branch
          %437 = sbr.rel (%p435) target = $region89
        $region88: #{sage_forward.2} parent=43 // pred_region
          %s438 = smul.u32 16, %s24
          %p439 = scmp.lt.s32.totalorder %s438, 31
          %s440 = scalar_select %p439, %s438, 31
          %s441 = smul.addr %s440, 4
          %s442 = scalar_lea.vmem %s1, %s441
          %s443 = smul.u32 16, %s24
        $region89: #{sage_forward.2} parent=43 // pred_fallthru
          _
      $region44: #{sage_forward.2} parent=5 // pred_fallthru
        _
      %p444 = scmp.le.s32.totalorder 1, %s17
      %p445 = scmp.lt.s32.totalorder %s17, 5
      %p446 = pnand %p444, %p445
      %p447 = pneg %p446
      // Predicated region
      $region90: #{sage_forward.2} parent=5 // pred_check
        _
      $region91: #{sage_forward.2} parent=5 // pred_check_branch
        %449 = sbr.rel (%p446) target = $region93
      $region92: #{sage_forward.2} parent=5 // pred_region
        %s450 = ssub.s32 %s17, 1
        %s451 = sand.u32 %s44, 1
        %s452 = sand.u32 %s44, 1
        %s453 = smul.addr %s452, 64
        %s454 = scalar_lea.vmem [#allocation3], %s453
        // Predicated region
        $region94: #{sage_forward.2} parent=92 // pred_check
          %p455 = pneg %p57
        $region95: #{sage_forward.2} parent=92 // pred_check_branch
          %457 = sbr.rel (%p455) target = $region97
        $region96: #{sage_forward.2} parent=92 // pred_region
          _
        $region97: #{sage_forward.2} parent=92 // pred_fallthru
          _
        %s458 = sand.u32 %s44, 1
        %s459 = sand.u32 %s44, 1
        %s460 = smul.addr %s459, 64
        %s461 = scalar_lea.vmem [#allocation3], %s460
        %p462 = pneg %p57
        %p463 = pneg %p54
        %s464 = smul.u32 16, %s26
        %p465 = scmp.lt.s32.totalorder %s464, 31
        %s466 = scalar_select %p465, %s464, 31
        %s467 = smul.addr %s466, 4
        %s468 = scalar_lea.vmem %s1, %s467
        %p469 = pneg %p83
        %p470 = pneg %p80
        %p471 = pneg %p104
        %p472 = pneg %p101
        %p473 = pneg %p125
        %p474 = pneg %p122
        %p475 = pneg %p146
        %p476 = pneg %p143
        %p477 = pneg %p167
        %p478 = pneg %p164
        %p479 = pneg %p188
        %p480 = pneg %p185
        %p481 = pneg %p209
        %p482 = pneg %p206
        %p483 = pneg %p230
        %p484 = pneg %p227
        %p485 = pneg %p256
        %p486 = pneg %p253
        %s487 = smul.u32 16, %s26
        %p488 = scmp.lt.s32.totalorder %s487, 31
        %s489 = scalar_select %p488, %s487, 31
        %s490 = smul.addr %s489, 8
        %s491 = scalar_lea.vmem %s9, %s490
        %p492 = pneg %p282
        %p493 = pneg %p279
        %s494 = smul.u32 16, %s26
        %p495 = scmp.lt.s32.totalorder %s494, 31
        %s496 = scalar_select %p495, %s494, 31
        %s497 = smul.addr %s496, 4
        %s498 = scalar_lea.vmem %s10, %s497
        %s499 = smul.u32 16, %s26
        %s500 = smul.u32 16, %s26
        %p501 = scmp.lt.s32.totalorder %s500, 31
        %s502 = scalar_select %p501, %s500, 31
        %s503 = smul.addr %s502, 4
        %s504 = scalar_lea.vmem %s1, %s503
        %s505 = smul.u32 16, %s26
        %s506 = smul.u32 16, %s26
        %p507 = scmp.lt.s32.totalorder %s506, 31
        %s508 = scalar_select %p507, %s506, 31
        %s509 = smul.addr %s508, 8
        %s510 = scalar_lea.vmem %s9, %s509
        %s511 = smul.u32 16, %s26
        %s512 = smul.u32 16, %s26
        %p513 = scmp.lt.s32.totalorder %s512, 31
        %s514 = scalar_select %p513, %s512, 31
        %s515 = smul.addr %s514, 4
        %s516 = scalar_lea.vmem %s10, %s515
        %s517 = smul.u32 16, %s26
        %p519 = scmp.eq.s32.totalorder %s27, 0
        // Predicated region
        $region98: #{sage_forward.2} parent=92 // pred_check
          %p520 = pneg %p519
        $region99: #{sage_forward.2} parent=92 // pred_check_branch
          %522 = sbr.rel (%p520) target = $region101
        $region100: #{sage_forward.2} parent=92 // pred_region
          %523 = vst [vmem:[#allocation2] sm:$0xff] 0.0
          %524 = vst [vmem:[#allocation2 + $0x8] sm:$0xff] 0.0
          %525 = vst [vmem:[#allocation2 + $0x10] sm:$0xff] 0.0
          %526 = vst [vmem:[#allocation2 + $0x18] sm:$0xff] 0.0
          %527 = vst [vmem:[#allocation2 + $0x20] sm:$0xff] 0.0
          %528 = vst [vmem:[#allocation2 + $0x28] sm:$0xff] 0.0
          %529 = vst [vmem:[#allocation2 + $0x30] sm:$0xff] 0.0
          %530 = vst [vmem:[#allocation2 + $0x38] sm:$0xff] 0.0
          %531 = vst [vmem:[#allocation2 + $0x40] sm:$0xff] 0.0
          %532 = vst [vmem:[#allocation2 + $0x48] sm:$0xff] 0.0
          %533 = vst [vmem:[#allocation2 + $0x50] sm:$0xff] 0.0
          %534 = vst [vmem:[#allocation2 + $0x58] sm:$0xff] 0.0
          %535 = vst [vmem:[#allocation2 + $0x60] sm:$0xff] 0.0
          %536 = vst [vmem:[#allocation2 + $0x68] sm:$0xff] 0.0
          %537 = vst [vmem:[#allocation2 + $0x70] sm:$0xff] 0.0
          %538 = vst [vmem:[#allocation2 + $0x78] sm:$0xff] 0.0
        $region101: #{sage_forward.2} parent=92 // pred_fallthru
          _
        %s539 = smul.u32 %s27, 128
        %s540 = sshra.s32 %s539, 3
        %s541 = sand.u32 %s539, 7
        %s542 = smul.addr %s540, 4
        %s543 = scalar_lea.vmem %s2, %s542
        %v544 = vld [vmem:[%s543] sm:$0xf]
        %v545 = vld [vmem:[%s543 + $0x4] sm:$0xf]
        %v546 = vld [vmem:[%s543 + $0x8] sm:$0xf]
        %v547 = vld [vmem:[%s543 + $0xc] sm:$0xf]
        %v548 = vld [vmem:[%s543 + $0x10] sm:$0xf]
        %v549 = vld [vmem:[%s543 + $0x14] sm:$0xf]
        %v550 = vld [vmem:[%s543 + $0x18] sm:$0xf]
        %v551 = vld [vmem:[%s543 + $0x1c] sm:$0xf]
        %v552 = vld [vmem:[%s543 + $0x20] sm:$0xf]
        %v553 = vld [vmem:[%s543 + $0x24] sm:$0xf]
        %v554 = vld [vmem:[%s543 + $0x28] sm:$0xf]
        %v555 = vld [vmem:[%s543 + $0x2c] sm:$0xf]
        %v556 = vld [vmem:[%s543 + $0x30] sm:$0xf]
        %v557 = vld [vmem:[%s543 + $0x34] sm:$0xf]
        %v558 = vld [vmem:[%s543 + $0x38] sm:$0xf]
        %v559 = vld [vmem:[%s543 + $0x3c] sm:$0xf]
        %v560 = vld [vmem:[#allocation2] sm:$0xff]
        %v561 = vld [vmem:[#allocation2 + $0x8] sm:$0xff]
        %v562 = vld [vmem:[#allocation2 + $0x10] sm:$0xff]
        %v563 = vld [vmem:[#allocation2 + $0x18] sm:$0xff]
        %v564 = vld [vmem:[#allocation2 + $0x20] sm:$0xff]
        %v565 = vld [vmem:[#allocation2 + $0x28] sm:$0xff]
        %v566 = vld [vmem:[#allocation2 + $0x30] sm:$0xff]
        %v567 = vld [vmem:[#allocation2 + $0x38] sm:$0xff]
        %v568 = vld [vmem:[#allocation2 + $0x40] sm:$0xff]
        %v569 = vld [vmem:[#allocation2 + $0x48] sm:$0xff]
        %v570 = vld [vmem:[#allocation2 + $0x50] sm:$0xff]
        %v571 = vld [vmem:[#allocation2 + $0x58] sm:$0xff]
        %v572 = vld [vmem:[#allocation2 + $0x60] sm:$0xff]
        %v573 = vld [vmem:[#allocation2 + $0x68] sm:$0xff]
        %v574 = vld [vmem:[#allocation2 + $0x70] sm:$0xff]
        %v575 = vld [vmem:[#allocation2 + $0x78] sm:$0xff]
        %v576 = vld [vmem:[%s454] sm:$0xf]
        %v577 = vld [vmem:[%s454 + $0x4] sm:$0xf]
        %v578 = vld [vmem:[%s454 + $0x8] sm:$0xf]
        %v579 = vld [vmem:[%s454 + $0xc] sm:$0xf]
        %v580 = vld [vmem:[%s454 + $0x10] sm:$0xf]
        %v581 = vld [vmem:[%s454 + $0x14] sm:$0xf]
        %v582 = vld [vmem:[%s454 + $0x18] sm:$0xf]
        %v583 = vld [vmem:[%s454 + $0x1c] sm:$0xf]
        %v584 = vld [vmem:[%s454 + $0x20] sm:$0xf]
        %v585 = vld [vmem:[%s454 + $0x24] sm:$0xf]
        %v586 = vld [vmem:[%s454 + $0x28] sm:$0xf]
        %v587 = vld [vmem:[%s454 + $0x2c] sm:$0xf]
        %v588 = vld [vmem:[%s454 + $0x30] sm:$0xf]
        %v589 = vld [vmem:[%s454 + $0x34] sm:$0xf]
        %v590 = vld [vmem:[%s454 + $0x38] sm:$0xf]
        %v591 = vld [vmem:[%s454 + $0x3c] sm:$0xf]
        %v608 = vunpack.c.l.b16 %v576
        %v609 = vunpack.c.l.b16 %v577
        %v610 = vunpack.c.l.b16 %v578
        %v611 = vunpack.c.l.b16 %v579
        %v612 = vunpack.c.l.b16 %v580
        %v613 = vunpack.c.l.b16 %v581
        %v614 = vunpack.c.l.b16 %v582
        %v615 = vunpack.c.l.b16 %v583
        %v616 = vunpack.c.l.b16 %v584
        %v617 = vunpack.c.l.b16 %v585
        %v618 = vunpack.c.l.b16 %v586
        %v619 = vunpack.c.l.b16 %v587
        %v620 = vunpack.c.l.b16 %v588
        %v621 = vunpack.c.l.b16 %v589
        %v622 = vunpack.c.l.b16 %v590
        %v623 = vunpack.c.l.b16 %v591
        %v624 = vpack.c.b16 %v609, %v608
        %v625 = vpack.c.b16 %v611, %v610
        %v626 = vpack.c.b16 %v613, %v612
        %v627 = vpack.c.b16 %v615, %v614
        %v628 = vpack.c.b16 %v617, %v616
        %v629 = vpack.c.b16 %v619, %v618
        %v630 = vpack.c.b16 %v621, %v620
        %v631 = vpack.c.b16 %v623, %v622
        %v656 = vunpack.c.l.b16 %v544
        %v657 = vunpack.c.l.b16 %v545
        %v658 = vunpack.c.l.b16 %v546
        %v659 = vunpack.c.l.b16 %v547
        %v660 = vunpack.c.l.b16 %v548
        %v661 = vunpack.c.l.b16 %v549
        %v662 = vunpack.c.l.b16 %v550
        %v663 = vunpack.c.l.b16 %v551
        %v664 = vunpack.c.l.b16 %v552
        %v665 = vunpack.c.l.b16 %v553
        %v666 = vunpack.c.l.b16 %v554
        %v667 = vunpack.c.l.b16 %v555
        %v668 = vunpack.c.l.b16 %v556
        %v669 = vunpack.c.l.b16 %v557
        %v670 = vunpack.c.l.b16 %v558
        %v671 = vunpack.c.l.b16 %v559
        %v672 = vpack.c.b16 %v657, %v656
        %v673 = vpack.c.b16 %v659, %v658
        %v674 = vpack.c.b16 %v661, %v660
        %v675 = vpack.c.b16 %v663, %v662
        %v676 = vpack.c.b16 %v665, %v664
        %v677 = vpack.c.b16 %v667, %v666
        %v678 = vpack.c.b16 %v669, %v668
        %v679 = vpack.c.b16 %v671, %v670
        %688 = vmatprep.subr.bf16.mxu0 0
        %689 = vmatpush1.bf16.msra.mxu0 %v679
        %690 = vmatprep.subr.bf16.mxu0 0
        %691 = vmatpush1.bf16.msra.mxu0 %v678
        %692 = vmatprep.subr.bf16.mxu0 0
        %693 = vmatpush1.bf16.msra.mxu0 %v677
        %694 = vmatprep.subr.bf16.mxu0 0
        %695 = vmatpush1.bf16.msra.mxu0 %v676
        %696 = vmatprep.subr.bf16.mxu0 0
        %697 = vmatpush1.bf16.msra.mxu0 %v675
        %698 = vmatprep.subr.bf16.mxu0 0
        %699 = vmatpush1.bf16.msra.mxu0 %v674
        %700 = vmatprep.subr.bf16.mxu0 0
        %701 = vmatpush1.bf16.msra.mxu0 %v673
        %702 = vmatprep.subr.bf16.mxu0 0
        %703 = vmatpush1.bf16.msra.mxu0 %v672
        %704 = vmatprep.subr.bf16.mxu0 0
        %705 = vmatpush2.bf16.msra.mxu0 0
        %706 = vmatprep.subr.bf16.mxu0 0
        %707 = vmatpush2.bf16.msra.mxu0 0
        %708 = vmatprep.subr.bf16.mxu0 0
        %709 = vmatpush2.bf16.msra.mxu0 0
        %710 = vmatprep.subr.bf16.mxu0 0
        %711 = vmatpush2.bf16.msra.mxu0 0
        %712 = vmatprep.subr.bf16.mxu0 0
        %713 = vmatpush2.bf16.msra.mxu0 0
        %714 = vmatprep.subr.bf16.mxu0 0
        %715 = vmatpush2.bf16.msra.mxu0 0
        %716 = vmatprep.subr.bf16.mxu0 0
        %717 = vmatpush2.bf16.msra.mxu0 0
        %718 = vmatprep.subr.bf16.mxu0 0
        %719 = vmatpush2.bf16.msra.mxu0 0
        %720 = vmatprep.mubr.bf16.mxu0 0
        %721 = vmatmul.mubr.bf16.gmra.mxu0 %v624
        %v722 = vpop.f32.mrf.mxu0
        %v723 = vadd.f32 0.0, %v722
        %v724 = vpop.f32.mrf.mxu0
        %v725 = vpop.f32.mrf.mxu0
        %v726 = vadd.f32 0.0, %v725
        %v727 = vpop.f32.mrf.mxu0
        %728 = vmatprep.mubr.bf16.mxu0 0
        %729 = vmatmul.mubr.bf16.gmra.mxu0 %v625
        %v730 = vpop.f32.mrf.mxu0
        %v731 = vadd.f32 0.0, %v730
        %v732 = vpop.f32.mrf.mxu0
        %v733 = vpop.f32.mrf.mxu0
        %v734 = vadd.f32 0.0, %v733
        %v735 = vpop.f32.mrf.mxu0
        %736 = vmatprep.mubr.bf16.mxu0 0
        %737 = vmatmul.mubr.bf16.gmra.mxu0 %v626
        %v738 = vpop.f32.mrf.mxu0
        %v739 = vadd.f32 0.0, %v738
        %v740 = vpop.f32.mrf.mxu0
        %v741 = vpop.f32.mrf.mxu0
        %v742 = vadd.f32 0.0, %v741
        %v743 = vpop.f32.mrf.mxu0
        %744 = vmatprep.mubr.bf16.mxu0 0
        %745 = vmatmul.mubr.bf16.gmra.mxu0 %v627
        %v746 = vpop.f32.mrf.mxu0
        %v747 = vadd.f32 0.0, %v746
        %v748 = vpop.f32.mrf.mxu0
        %v749 = vpop.f32.mrf.mxu0
        %v750 = vadd.f32 0.0, %v749
        %v751 = vpop.f32.mrf.mxu0
        %752 = vmatprep.mubr.bf16.mxu0 0
        %753 = vmatmul.mubr.bf16.gmra.mxu0 %v628
        %v754 = vpop.f32.mrf.mxu0
        %v755 = vadd.f32 0.0, %v754
        %v756 = vpop.f32.mrf.mxu0
        %v757 = vpop.f32.mrf.mxu0
        %v758 = vadd.f32 0.0, %v757
        %v759 = vpop.f32.mrf.mxu0
        %760 = vmatprep.mubr.bf16.mxu0 0
        %761 = vmatmul.mubr.bf16.gmra.mxu0 %v629
        %v762 = vpop.f32.mrf.mxu0
        %v763 = vadd.f32 0.0, %v762
        %v764 = vpop.f32.mrf.mxu0
        %v765 = vpop.f32.mrf.mxu0
        %v766 = vadd.f32 0.0, %v765
        %v767 = vpop.f32.mrf.mxu0
        %768 = vmatprep.mubr.bf16.mxu0 0
        %769 = vmatmul.mubr.bf16.gmra.mxu0 %v630
        %v770 = vpop.f32.mrf.mxu0
        %v771 = vadd.f32 0.0, %v770
        %v772 = vpop.f32.mrf.mxu0
        %v773 = vpop.f32.mrf.mxu0
        %v774 = vadd.f32 0.0, %v773
        %v775 = vpop.f32.mrf.mxu0
        %776 = vmatprep.mubr.bf16.mxu0 0
        %777 = vmatmul.mubr.bf16.gmra.mxu0 %v631
        %v778 = vpop.f32.mrf.mxu0
        %v779 = vadd.f32 0.0, %v778
        %v780 = vpop.f32.mrf.mxu0
        %v781 = vpop.f32.mrf.mxu0
        %v782 = vadd.f32 0.0, %v781
        %v783 = vpop.f32.mrf.mxu0
        %784 = vdwg.mxu0
        %v785 = vadd.f32 %v560, %v723
        %v786 = vadd.f32 %v561, %v726
        %v787 = vadd.f32 %v562, %v731
        %v788 = vadd.f32 %v563, %v734
        %v789 = vadd.f32 %v564, %v739
        %v790 = vadd.f32 %v565, %v742
        %v791 = vadd.f32 %v566, %v747
        %v792 = vadd.f32 %v567, %v750
        %v793 = vadd.f32 %v568, %v755
        %v794 = vadd.f32 %v569, %v758
        %v795 = vadd.f32 %v570, %v763
        %v796 = vadd.f32 %v571, %v766
        %v797 = vadd.f32 %v572, %v771
        %v798 = vadd.f32 %v573, %v774
        %v799 = vadd.f32 %v574, %v779
        %v800 = vadd.f32 %v575, %v782
        %801 = vst [vmem:[#allocation2] sm:$0xff] %v785
        %802 = vst [vmem:[#allocation2 + $0x8] sm:$0xff] %v786
        %803 = vst [vmem:[#allocation2 + $0x10] sm:$0xff] %v787
        %804 = vst [vmem:[#allocation2 + $0x18] sm:$0xff] %v788
        %805 = vst [vmem:[#allocation2 + $0x20] sm:$0xff] %v789
        %806 = vst [vmem:[#allocation2 + $0x28] sm:$0xff] %v790
        %807 = vst [vmem:[#allocation2 + $0x30] sm:$0xff] %v791
        %808 = vst [vmem:[#allocation2 + $0x38] sm:$0xff] %v792
        %809 = vst [vmem:[#allocation2 + $0x40] sm:$0xff] %v793
        %810 = vst [vmem:[#allocation2 + $0x48] sm:$0xff] %v794
        %811 = vst [vmem:[#allocation2 + $0x50] sm:$0xff] %v795
        %812 = vst [vmem:[#allocation2 + $0x58] sm:$0xff] %v796
        %813 = vst [vmem:[#allocation2 + $0x60] sm:$0xff] %v797
        %814 = vst [vmem:[#allocation2 + $0x68] sm:$0xff] %v798
        %815 = vst [vmem:[#allocation2 + $0x70] sm:$0xff] %v799
        %816 = vst [vmem:[#allocation2 + $0x78] sm:$0xff] %v800
        %p817 = scmp.eq.s32.totalorder %s27, 1
        // Predicated region
        $region102: #{sage_forward.2} parent=92 // pred_check
          %p818 = pneg %p817
        $region103: #{sage_forward.2} parent=92 // pred_check_branch
          %820 = sbr.rel (%p818) target = $region105
        $region104: #{sage_forward.2} parent=92 // pred_region
          %v821 = vld [vmem:[#allocation2] sm:$0xff]
          %v822 = vld [vmem:[#allocation2 + $0x8] sm:$0xff]
          %v823 = vld [vmem:[#allocation2 + $0x10] sm:$0xff]
          %v824 = vld [vmem:[#allocation2 + $0x18] sm:$0xff]
          %v825 = vld [vmem:[#allocation2 + $0x20] sm:$0xff]
          %v826 = vld [vmem:[#allocation2 + $0x28] sm:$0xff]
          %v827 = vld [vmem:[#allocation2 + $0x30] sm:$0xff]
          %v828 = vld [vmem:[#allocation2 + $0x38] sm:$0xff]
          %v829 = vld [vmem:[#allocation2 + $0x40] sm:$0xff]
          %v830 = vld [vmem:[#allocation2 + $0x48] sm:$0xff]
          %v831 = vld [vmem:[#allocation2 + $0x50] sm:$0xff]
          %v832 = vld [vmem:[#allocation2 + $0x58] sm:$0xff]
          %v833 = vld [vmem:[#allocation2 + $0x60] sm:$0xff]
          %v834 = vld [vmem:[#allocation2 + $0x68] sm:$0xff]
          %v835 = vld [vmem:[#allocation2 + $0x70] sm:$0xff]
          %v836 = vld [vmem:[#allocation2 + $0x78] sm:$0xff]
          %v837 = vpack.c.bf16 %v822, %v821
          %v838 = vpack.c.bf16 %v824, %v823
          %v839 = vpack.c.bf16 %v826, %v825
          %v840 = vpack.c.bf16 %v828, %v827
          %v841 = vpack.c.bf16 %v830, %v829
          %v842 = vpack.c.bf16 %v832, %v831
          %v843 = vpack.c.bf16 %v834, %v833
          %v844 = vpack.c.bf16 %v836, %v835
          %v845 = vld [vmem:[%s504] sm:$0xf]
          %v846 = vld [vmem:[%s504 + $0x4] sm:$0xf]
          %v847 = vld [vmem:[%s504 + $0x8] sm:$0xf]
          %v848 = vld [vmem:[%s504 + $0xc] sm:$0xf]
          %v849 = vld [vmem:[%s504 + $0x10] sm:$0xf]
          %v850 = vld [vmem:[%s504 + $0x14] sm:$0xf]
          %v851 = vld [vmem:[%s504 + $0x18] sm:$0xf]
          %v852 = vld [vmem:[%s504 + $0x1c] sm:$0xf]
          %v853 = vld [vmem:[%s504 + $0x20] sm:$0xf]
          %v854 = vld [vmem:[%s504 + $0x24] sm:$0xf]
          %v855 = vld [vmem:[%s504 + $0x28] sm:$0xf]
          %v856 = vld [vmem:[%s504 + $0x2c] sm:$0xf]
          %v857 = vld [vmem:[%s504 + $0x30] sm:$0xf]
          %v858 = vld [vmem:[%s504 + $0x34] sm:$0xf]
          %v859 = vld [vmem:[%s504 + $0x38] sm:$0xf]
          %v860 = vld [vmem:[%s504 + $0x3c] sm:$0xf]
          %v861 = vld [vmem:[%s3] sm:$0xf]
          %v862 = vld [vmem:[%s3 + $0x4] sm:$0xf]
          %v863 = vld [vmem:[%s3 + $0x8] sm:$0xf]
          %v864 = vld [vmem:[%s3 + $0xc] sm:$0xf]
          %v865 = vld [vmem:[%s3 + $0x10] sm:$0xf]
          %v866 = vld [vmem:[%s3 + $0x14] sm:$0xf]
          %v867 = vld [vmem:[%s3 + $0x18] sm:$0xf]
          %v868 = vld [vmem:[%s3 + $0x1c] sm:$0xf]
          %v869 = vld [vmem:[%s3 + $0x20] sm:$0xf]
          %v870 = vld [vmem:[%s3 + $0x24] sm:$0xf]
          %v871 = vld [vmem:[%s3 + $0x28] sm:$0xf]
          %v872 = vld [vmem:[%s3 + $0x2c] sm:$0xf]
          %v873 = vld [vmem:[%s3 + $0x30] sm:$0xf]
          %v874 = vld [vmem:[%s3 + $0x34] sm:$0xf]
          %v875 = vld [vmem:[%s3 + $0x38] sm:$0xf]
          %v876 = vld [vmem:[%s3 + $0x3c] sm:$0xf]
          %v877 = vld [vmem:[%s4] sm:$0xf]
          %v878 = vld [vmem:[%s4 + $0x4] sm:$0xf]
          %v879 = vld [vmem:[%s4 + $0x8] sm:$0xf]
          %v880 = vld [vmem:[%s4 + $0xc] sm:$0xf]
          %v881 = vld [vmem:[%s4 + $0x10] sm:$0xf]
          %v882 = vld [vmem:[%s4 + $0x14] sm:$0xf]
          %v883 = vld [vmem:[%s4 + $0x18] sm:$0xf]
          %v884 = vld [vmem:[%s4 + $0x1c] sm:$0xf]
          %v885 = vld [vmem:[%s4 + $0x20] sm:$0xf]
          %v886 = vld [vmem:[%s4 + $0x24] sm:$0xf]
          %v887 = vld [vmem:[%s4 + $0x28] sm:$0xf]
          %v888 = vld [vmem:[%s4 + $0x2c] sm:$0xf]
          %v889 = vld [vmem:[%s4 + $0x30] sm:$0xf]
          %v890 = vld [vmem:[%s4 + $0x34] sm:$0xf]
          %v891 = vld [vmem:[%s4 + $0x38] sm:$0xf]
          %v892 = vld [vmem:[%s4 + $0x3c] sm:$0xf]
          %v909 = vunpack.c.l.b16 %v877
          %v910 = vunpack.c.l.b16 %v878
          %v911 = vunpack.c.l.b16 %v879
          %v912 = vunpack.c.l.b16 %v880
          %v913 = vunpack.c.l.b16 %v881
          %v914 = vunpack.c.l.b16 %v882
          %v915 = vunpack.c.l.b16 %v883
          %v916 = vunpack.c.l.b16 %v884
          %v917 = vunpack.c.l.b16 %v885
          %v918 = vunpack.c.l.b16 %v886
          %v919 = vunpack.c.l.b16 %v887
          %v920 = vunpack.c.l.b16 %v888
          %v921 = vunpack.c.l.b16 %v889
          %v922 = vunpack.c.l.b16 %v890
          %v923 = vunpack.c.l.b16 %v891
          %v924 = vunpack.c.l.b16 %v892
          %v925 = vpack.c.b16 %v910, %v909
          %v926 = vpack.c.b16 %v912, %v911
          %v927 = vpack.c.b16 %v914, %v913
          %v928 = vpack.c.b16 %v916, %v915
          %v929 = vpack.c.b16 %v918, %v917
          %v930 = vpack.c.b16 %v920, %v919
          %v931 = vpack.c.b16 %v922, %v921
          %v932 = vpack.c.b16 %v924, %v923
          %941 = vmatprep.subr.bf16.mxu0 0
          %942 = vmatpush1.bf16.msra.mxu0 %v932
          %943 = vmatprep.subr.bf16.mxu0 0
          %944 = vmatpush1.bf16.msra.mxu0 %v931
          %945 = vmatprep.subr.bf16.mxu0 0
          %946 = vmatpush1.bf16.msra.mxu0 %v930
          %947 = vmatprep.subr.bf16.mxu0 0
          %948 = vmatpush1.bf16.msra.mxu0 %v929
          %949 = vmatprep.subr.bf16.mxu0 0
          %950 = vmatpush1.bf16.msra.mxu0 %v928
          %951 = vmatprep.subr.bf16.mxu0 0
          %952 = vmatpush1.bf16.msra.mxu0 %v927
          %953 = vmatprep.subr.bf16.mxu0 0
          %954 = vmatpush1.bf16.msra.mxu0 %v926
          %955 = vmatprep.subr.bf16.mxu0 0
          %956 = vmatpush1.bf16.msra.mxu0 %v925
          %957 = vmatprep.subr.bf16.mxu0 0
          %958 = vmatpush2.bf16.msra.mxu0 0
          %959 = vmatprep.subr.bf16.mxu0 0
          %960 = vmatpush2.bf16.msra.mxu0 0
          %961 = vmatprep.subr.bf16.mxu0 0
          %962 = vmatpush2.bf16.msra.mxu0 0
          %963 = vmatprep.subr.bf16.mxu0 0
          %964 = vmatpush2.bf16.msra.mxu0 0
          %965 = vmatprep.subr.bf16.mxu0 0
          %966 = vmatpush2.bf16.msra.mxu0 0
          %967 = vmatprep.subr.bf16.mxu0 0
          %968 = vmatpush2.bf16.msra.mxu0 0
          %969 = vmatprep.subr.bf16.mxu0 0
          %970 = vmatpush2.bf16.msra.mxu0 0
          %971 = vmatprep.subr.bf16.mxu0 0
          %972 = vmatpush2.bf16.msra.mxu0 0
          %973 = vmatprep.mubr.bf16.mxu0 0
          %974 = vmatmul.mubr.bf16.gmra.mxu0 %v837
          %v975 = vpop.f32.mrf.mxu0
          %v976 = vadd.f32 0.0, %v975
          %v977 = vpop.f32.mrf.mxu0
          %v978 = vpop.f32.mrf.mxu0
          %v979 = vadd.f32 0.0, %v978
          %v980 = vpop.f32.mrf.mxu0
          %981 = vmatprep.mubr.bf16.mxu0 0
          %982 = vmatmul.mubr.bf16.gmra.mxu0 %v838
          %v983 = vpop.f32.mrf.mxu0
          %v984 = vadd.f32 0.0, %v983
          %v985 = vpop.f32.mrf.mxu0
          %v986 = vpop.f32.mrf.mxu0
          %v987 = vadd.f32 0.0, %v986
          %v988 = vpop.f32.mrf.mxu0
          %989 = vmatprep.mubr.bf16.mxu0 0
          %990 = vmatmul.mubr.bf16.gmra.mxu0 %v839
          %v991 = vpop.f32.mrf.mxu0
          %v992 = vadd.f32 0.0, %v991
          %v993 = vpop.f32.mrf.mxu0
          %v994 = vpop.f32.mrf.mxu0
          %v995 = vadd.f32 0.0, %v994
          %v996 = vpop.f32.mrf.mxu0
          %997 = vmatprep.mubr.bf16.mxu0 0
          %998 = vmatmul.mubr.bf16.gmra.mxu0 %v840
          %v999 = vpop.f32.mrf.mxu0
          %v1000 = vadd.f32 0.0, %v999
          %v1001 = vpop.f32.mrf.mxu0
          %v1002 = vpop.f32.mrf.mxu0
          %v1003 = vadd.f32 0.0, %v1002
          %v1004 = vpop.f32.mrf.mxu0
          %1005 = vmatprep.mubr.bf16.mxu0 0
          %1006 = vmatmul.mubr.bf16.gmra.mxu0 %v841
          %v1007 = vpop.f32.mrf.mxu0
          %v1008 = vadd.f32 0.0, %v1007
          %v1009 = vpop.f32.mrf.mxu0
          %v1010 = vpop.f32.mrf.mxu0
          %v1011 = vadd.f32 0.0, %v1010
          %v1012 = vpop.f32.mrf.mxu0
          %1013 = vmatprep.mubr.bf16.mxu0 0
          %1014 = vmatmul.mubr.bf16.gmra.mxu0 %v842
          %v1015 = vpop.f32.mrf.mxu0
          %v1016 = vadd.f32 0.0, %v1015
          %v1017 = vpop.f32.mrf.mxu0
          %v1018 = vpop.f32.mrf.mxu0
          %v1019 = vadd.f32 0.0, %v1018
          %v1020 = vpop.f32.mrf.mxu0
          %1021 = vmatprep.mubr.bf16.mxu0 0
          %1022 = vmatmul.mubr.bf16.gmra.mxu0 %v843
          %v1023 = vpop.f32.mrf.mxu0
          %v1024 = vadd.f32 0.0, %v1023
          %v1025 = vpop.f32.mrf.mxu0
          %v1026 = vpop.f32.mrf.mxu0
          %v1027 = vadd.f32 0.0, %v1026
          %v1028 = vpop.f32.mrf.mxu0
          %1029 = vmatprep.mubr.bf16.mxu0 0
          %1030 = vmatmul.mubr.bf16.gmra.mxu0 %v844
          %v1031 = vpop.f32.mrf.mxu0
          %v1032 = vadd.f32 0.0, %v1031
          %v1033 = vpop.f32.mrf.mxu0
          %v1034 = vpop.f32.mrf.mxu0
          %v1035 = vadd.f32 0.0, %v1034
          %v1036 = vpop.f32.mrf.mxu0
          %1037 = vdwg.mxu0
          %v1054 = vunpack.c.l.b16 %v845
          %v1055 = vunpack.c.l.b16 %v846
          %v1056 = vunpack.c.l.b16 %v847
          %v1057 = vunpack.c.l.b16 %v848
          %v1058 = vunpack.c.l.b16 %v849
          %v1059 = vunpack.c.l.b16 %v850
          %v1060 = vunpack.c.l.b16 %v851
          %v1061 = vunpack.c.l.b16 %v852
          %v1062 = vunpack.c.l.b16 %v853
          %v1063 = vunpack.c.l.b16 %v854
          %v1064 = vunpack.c.l.b16 %v855
          %v1065 = vunpack.c.l.b16 %v856
          %v1066 = vunpack.c.l.b16 %v857
          %v1067 = vunpack.c.l.b16 %v858
          %v1068 = vunpack.c.l.b16 %v859
          %v1069 = vunpack.c.l.b16 %v860
          %v1070 = vpack.c.b16 %v1055, %v1054
          %v1071 = vpack.c.b16 %v1057, %v1056
          %v1072 = vpack.c.b16 %v1059, %v1058
          %v1073 = vpack.c.b16 %v1061, %v1060
          %v1074 = vpack.c.b16 %v1063, %v1062
          %v1075 = vpack.c.b16 %v1065, %v1064
          %v1076 = vpack.c.b16 %v1067, %v1066
          %v1077 = vpack.c.b16 %v1069, %v1068
          %v1102 = vunpack.c.l.b16 %v861
          %v1103 = vunpack.c.l.b16 %v862
          %v1104 = vunpack.c.l.b16 %v863
          %v1105 = vunpack.c.l.b16 %v864
          %v1106 = vunpack.c.l.b16 %v865
          %v1107 = vunpack.c.l.b16 %v866
          %v1108 = vunpack.c.l.b16 %v867
          %v1109 = vunpack.c.l.b16 %v868
          %v1110 = vunpack.c.l.b16 %v869
          %v1111 = vunpack.c.l.b16 %v870
          %v1112 = vunpack.c.l.b16 %v871
          %v1113 = vunpack.c.l.b16 %v872
          %v1114 = vunpack.c.l.b16 %v873
          %v1115 = vunpack.c.l.b16 %v874
          %v1116 = vunpack.c.l.b16 %v875
          %v1117 = vunpack.c.l.b16 %v876
          %v1118 = vpack.c.b16 %v1103, %v1102
          %v1119 = vpack.c.b16 %v1105, %v1104
          %v1120 = vpack.c.b16 %v1107, %v1106
          %v1121 = vpack.c.b16 %v1109, %v1108
          %v1122 = vpack.c.b16 %v1111, %v1110
          %v1123 = vpack.c.b16 %v1113, %v1112
          %v1124 = vpack.c.b16 %v1115, %v1114
          %v1125 = vpack.c.b16 %v1117, %v1116
          %1134 = vmatprep.subr.bf16.mxu0 0
          %1135 = vmatpush1.bf16.msra.mxu0 %v1125
          %1136 = vmatprep.subr.bf16.mxu0 0
          %1137 = vmatpush1.bf16.msra.mxu0 %v1124
          %1138 = vmatprep.subr.bf16.mxu0 0
          %1139 = vmatpush1.bf16.msra.mxu0 %v1123
          %1140 = vmatprep.subr.bf16.mxu0 0
          %1141 = vmatpush1.bf16.msra.mxu0 %v1122
          %1142 = vmatprep.subr.bf16.mxu0 0
          %1143 = vmatpush1.bf16.msra.mxu0 %v1121
          %1144 = vmatprep.subr.bf16.mxu0 0
          %1145 = vmatpush1.bf16.msra.mxu0 %v1120
          %1146 = vmatprep.subr.bf16.mxu0 0
          %1147 = vmatpush1.bf16.msra.mxu0 %v1119
          %1148 = vmatprep.subr.bf16.mxu0 0
          %1149 = vmatpush1.bf16.msra.mxu0 %v1118
          %1150 = vmatprep.subr.bf16.mxu0 0
          %1151 = vmatpush2.bf16.msra.mxu0 0
          %1152 = vmatprep.subr.bf16.mxu0 0
          %1153 = vmatpush2.bf16.msra.mxu0 0
          %1154 = vmatprep.subr.bf16.mxu0 0
          %1155 = vmatpush2.bf16.msra.mxu0 0
          %1156 = vmatprep.subr.bf16.mxu0 0
          %1157 = vmatpush2.bf16.msra.mxu0 0
          %1158 = vmatprep.subr.bf16.mxu0 0
          %1159 = vmatpush2.bf16.msra.mxu0 0
          %1160 = vmatprep.subr.bf16.mxu0 0
          %1161 = vmatpush2.bf16.msra.mxu0 0
          %1162 = vmatprep.subr.bf16.mxu0 0
          %1163 = vmatpush2.bf16.msra.mxu0 0
          %1164 = vmatprep.subr.bf16.mxu0 0
          %1165 = vmatpush2.bf16.msra.mxu0 0
          %1166 = vmatprep.mubr.bf16.mxu0 0
          %1167 = vmatmul.mubr.bf16.gmra.mxu0 %v1070
          %v1168 = vpop.f32.mrf.mxu0
          %v1169 = vadd.f32 %v976, %v1168
          %v1170 = vpop.f32.mrf.mxu0
          %v1171 = vpop.f32.mrf.mxu0
          %v1172 = vadd.f32 %v979, %v1171
          %v1173 = vpop.f32.mrf.mxu0
          %1174 = vmatprep.mubr.bf16.mxu0 0
          %1175 = vmatmul.mubr.bf16.gmra.mxu0 %v1071
          %v1176 = vpop.f32.mrf.mxu0
          %v1177 = vadd.f32 %v984, %v1176
          %v1178 = vpop.f32.mrf.mxu0
          %v1179 = vpop.f32.mrf.mxu0
          %v1180 = vadd.f32 %v987, %v1179
          %v1181 = vpop.f32.mrf.mxu0
          %1182 = vmatprep.mubr.bf16.mxu0 0
          %1183 = vmatmul.mubr.bf16.gmra.mxu0 %v1072
          %v1184 = vpop.f32.mrf.mxu0
          %v1185 = vadd.f32 %v992, %v1184
          %v1186 = vpop.f32.mrf.mxu0
          %v1187 = vpop.f32.mrf.mxu0
          %v1188 = vadd.f32 %v995, %v1187
          %v1189 = vpop.f32.mrf.mxu0
          %1190 = vmatprep.mubr.bf16.mxu0 0
          %1191 = vmatmul.mubr.bf16.gmra.mxu0 %v1073
          %v1192 = vpop.f32.mrf.mxu0
          %v1193 = vadd.f32 %v1000, %v1192
          %v1194 = vpop.f32.mrf.mxu0
          %v1195 = vpop.f32.mrf.mxu0
          %v1196 = vadd.f32 %v1003, %v1195
          %v1197 = vpop.f32.mrf.mxu0
          %1198 = vmatprep.mubr.bf16.mxu0 0
          %1199 = vmatmul.mubr.bf16.gmra.mxu0 %v1074
          %v1200 = vpop.f32.mrf.mxu0
          %v1201 = vadd.f32 %v1008, %v1200
          %v1202 = vpop.f32.mrf.mxu0
          %v1203 = vpop.f32.mrf.mxu0
          %v1204 = vadd.f32 %v1011, %v1203
          %v1205 = vpop.f32.mrf.mxu0
          %1206 = vmatprep.mubr.bf16.mxu0 0
          %1207 = vmatmul.mubr.bf16.gmra.mxu0 %v1075
          %v1208 = vpop.f32.mrf.mxu0
          %v1209 = vadd.f32 %v1016, %v1208
          %v1210 = vpop.f32.mrf.mxu0
          %v1211 = vpop.f32.mrf.mxu0
          %v1212 = vadd.f32 %v1019, %v1211
          %v1213 = vpop.f32.mrf.mxu0
          %1214 = vmatprep.mubr.bf16.mxu0 0
          %1215 = vmatmul.mubr.bf16.gmra.mxu0 %v1076
          %v1216 = vpop.f32.mrf.mxu0
          %v1217 = vadd.f32 %v1024, %v1216
          %v1218 = vpop.f32.mrf.mxu0
          %v1219 = vpop.f32.mrf.mxu0
          %v1220 = vadd.f32 %v1027, %v1219
          %v1221 = vpop.f32.mrf.mxu0
          %1222 = vmatprep.mubr.bf16.mxu0 0
          %1223 = vmatmul.mubr.bf16.gmra.mxu0 %v1077
          %v1224 = vpop.f32.mrf.mxu0
          %v1225 = vadd.f32 %v1032, %v1224
          %v1226 = vpop.f32.mrf.mxu0
          %v1227 = vpop.f32.mrf.mxu0
          %v1228 = vadd.f32 %v1035, %v1227
          %v1229 = vpop.f32.mrf.mxu0
          %1230 = vdwg.mxu0
          %v1231 = vld [vmem:[%s5] sm:$0x1]
          %v1233 = vlaneseq
          %v1234 = vshrl.u32 %v1233, 7
          %v1235 = vsub.s32 0, %v1234
          %v1236 = vrot.slane %v1231, %v1235
          %v1238 = vadd.f32 %v1169, %v1236
          %v1239 = vadd.f32 %v1172, %v1236
          %v1240 = vadd.f32 %v1177, %v1236
          %v1241 = vadd.f32 %v1180, %v1236
          %v1242 = vadd.f32 %v1185, %v1236
          %v1243 = vadd.f32 %v1188, %v1236
          %v1244 = vadd.f32 %v1193, %v1236
          %v1245 = vadd.f32 %v1196, %v1236
          %v1246 = vadd.f32 %v1201, %v1236
          %v1247 = vadd.f32 %v1204, %v1236
          %v1248 = vadd.f32 %v1209, %v1236
          %v1249 = vadd.f32 %v1212, %v1236
          %v1250 = vadd.f32 %v1217, %v1236
          %v1251 = vadd.f32 %v1220, %v1236
          %v1252 = vadd.f32 %v1225, %v1236
          %v1253 = vadd.f32 %v1228, %v1236
          %v1254 = vmax.f32 %v1238, 0.0
          %v1255 = vmax.f32 %v1239, 0.0
          %v1256 = vmax.f32 %v1240, 0.0
          %v1257 = vmax.f32 %v1241, 0.0
          %v1258 = vmax.f32 %v1242, 0.0
          %v1259 = vmax.f32 %v1243, 0.0
          %v1260 = vmax.f32 %v1244, 0.0
          %v1261 = vmax.f32 %v1245, 0.0
          %v1262 = vmax.f32 %v1246, 0.0
          %v1263 = vmax.f32 %v1247, 0.0
          %v1264 = vmax.f32 %v1248, 0.0
          %v1265 = vmax.f32 %v1249, 0.0
          %v1266 = vmax.f32 %v1250, 0.0
          %v1267 = vmax.f32 %v1251, 0.0
          %v1268 = vmax.f32 %v1252, 0.0
          %v1269 = vmax.f32 %v1253, 0.0
          %v1270 = vpack.c.bf16 %v1255, %v1254
          %v1271 = vpack.c.bf16 %v1257, %v1256
          %v1272 = vpack.c.bf16 %v1259, %v1258
          %v1273 = vpack.c.bf16 %v1261, %v1260
          %v1274 = vpack.c.bf16 %v1263, %v1262
          %v1275 = vpack.c.bf16 %v1265, %v1264
          %v1276 = vpack.c.bf16 %v1267, %v1266
          %v1277 = vpack.c.bf16 %v1269, %v1268
          %v1278 = vld [vmem:[%s7] sm:$0xf]
          %v1279 = vld [vmem:[%s7 + $0x4] sm:$0xf]
          %v1280 = vld [vmem:[%s7 + $0x8] sm:$0xf]
          %v1281 = vld [vmem:[%s7 + $0xc] sm:$0xf]
          %v1282 = vld [vmem:[%s7 + $0x10] sm:$0xf]
          %v1283 = vld [vmem:[%s7 + $0x14] sm:$0xf]
          %v1284 = vld [vmem:[%s7 + $0x18] sm:$0xf]
          %v1285 = vld [vmem:[%s7 + $0x1c] sm:$0xf]
          %v1286 = vld [vmem:[%s7 + $0x20] sm:$0xf]
          %v1287 = vld [vmem:[%s7 + $0x24] sm:$0xf]
          %v1288 = vld [vmem:[%s7 + $0x28] sm:$0xf]
          %v1289 = vld [vmem:[%s7 + $0x2c] sm:$0xf]
          %v1290 = vld [vmem:[%s7 + $0x30] sm:$0xf]
          %v1291 = vld [vmem:[%s7 + $0x34] sm:$0xf]
          %v1292 = vld [vmem:[%s7 + $0x38] sm:$0xf]
          %v1293 = vld [vmem:[%s7 + $0x3c] sm:$0xf]
          %v1310 = vunpack.c.l.b16 %v1278
          %v1311 = vunpack.c.l.b16 %v1279
          %v1312 = vunpack.c.l.b16 %v1280
          %v1313 = vunpack.c.l.b16 %v1281
          %v1314 = vunpack.c.l.b16 %v1282
          %v1315 = vunpack.c.l.b16 %v1283
          %v1316 = vunpack.c.l.b16 %v1284
          %v1317 = vunpack.c.l.b16 %v1285
          %v1318 = vunpack.c.l.b16 %v1286
          %v1319 = vunpack.c.l.b16 %v1287
          %v1320 = vunpack.c.l.b16 %v1288
          %v1321 = vunpack.c.l.b16 %v1289
          %v1322 = vunpack.c.l.b16 %v1290
          %v1323 = vunpack.c.l.b16 %v1291
          %v1324 = vunpack.c.l.b16 %v1292
          %v1325 = vunpack.c.l.b16 %v1293
          %v1326 = vpack.c.b16 %v1311, %v1310
          %v1327 = vpack.c.b16 %v1313, %v1312
          %v1328 = vpack.c.b16 %v1315, %v1314
          %v1329 = vpack.c.b16 %v1317, %v1316
          %v1330 = vpack.c.b16 %v1319, %v1318
          %v1331 = vpack.c.b16 %v1321, %v1320
          %v1332 = vpack.c.b16 %v1323, %v1322
          %v1333 = vpack.c.b16 %v1325, %v1324
          %1342 = vmatprep.subr.bf16.mxu0 0
          %1343 = vmatpush1.bf16.msra.mxu0 %v1333
          %1344 = vmatprep.subr.bf16.mxu0 0
          %1345 = vmatpush1.bf16.msra.mxu0 %v1332
          %1346 = vmatprep.subr.bf16.mxu0 0
          %1347 = vmatpush1.bf16.msra.mxu0 %v1331
          %1348 = vmatprep.subr.bf16.mxu0 0
          %1349 = vmatpush1.bf16.msra.mxu0 %v1330
          %1350 = vmatprep.subr.bf16.mxu0 0
          %1351 = vmatpush1.bf16.msra.mxu0 %v1329
          %1352 = vmatprep.subr.bf16.mxu0 0
          %1353 = vmatpush1.bf16.msra.mxu0 %v1328
          %1354 = vmatprep.subr.bf16.mxu0 0
          %1355 = vmatpush1.bf16.msra.mxu0 %v1327
          %1356 = vmatprep.subr.bf16.mxu0 0
          %1357 = vmatpush1.bf16.msra.mxu0 %v1326
          %1358 = vmatprep.subr.bf16.mxu0 0
          %1359 = vmatpush2.bf16.msra.mxu0 0
          %1360 = vmatprep.subr.bf16.mxu0 0
          %1361 = vmatpush2.bf16.msra.mxu0 0
          %1362 = vmatprep.subr.bf16.mxu0 0
          %1363 = vmatpush2.bf16.msra.mxu0 0
          %1364 = vmatprep.subr.bf16.mxu0 0
          %1365 = vmatpush2.bf16.msra.mxu0 0
          %1366 = vmatprep.subr.bf16.mxu0 0
          %1367 = vmatpush2.bf16.msra.mxu0 0
          %1368 = vmatprep.subr.bf16.mxu0 0
          %1369 = vmatpush2.bf16.msra.mxu0 0
          %1370 = vmatprep.subr.bf16.mxu0 0
          %1371 = vmatpush2.bf16.msra.mxu0 0
          %1372 = vmatprep.subr.bf16.mxu0 0
          %1373 = vmatpush2.bf16.msra.mxu0 0
          %1374 = vmatprep.mubr.bf16.mxu0 0
          %1375 = vmatmul.mubr.bf16.gmra.mxu0 %v1270
          %v1376 = vpop.f32.mrf.mxu0
          %v1377 = vadd.f32 0.0, %v1376
          %v1378 = vpop.f32.mrf.mxu0
          %v1379 = vpop.f32.mrf.mxu0
          %v1380 = vadd.f32 0.0, %v1379
          %v1381 = vpop.f32.mrf.mxu0
          %1382 = vmatprep.mubr.bf16.mxu0 0
          %1383 = vmatmul.mubr.bf16.gmra.mxu0 %v1271
          %v1384 = vpop.f32.mrf.mxu0
          %v1385 = vadd.f32 0.0, %v1384
          %v1386 = vpop.f32.mrf.mxu0
          %v1387 = vpop.f32.mrf.mxu0
          %v1388 = vadd.f32 0.0, %v1387
          %v1389 = vpop.f32.mrf.mxu0
          %1390 = vmatprep.mubr.bf16.mxu0 0
          %1391 = vmatmul.mubr.bf16.gmra.mxu0 %v1272
          %v1392 = vpop.f32.mrf.mxu0
          %v1393 = vadd.f32 0.0, %v1392
          %v1394 = vpop.f32.mrf.mxu0
          %v1395 = vpop.f32.mrf.mxu0
          %v1396 = vadd.f32 0.0, %v1395
          %v1397 = vpop.f32.mrf.mxu0
          %1398 = vmatprep.mubr.bf16.mxu0 0
          %1399 = vmatmul.mubr.bf16.gmra.mxu0 %v1273
          %v1400 = vpop.f32.mrf.mxu0
          %v1401 = vadd.f32 0.0, %v1400
          %v1402 = vpop.f32.mrf.mxu0
          %v1403 = vpop.f32.mrf.mxu0
          %v1404 = vadd.f32 0.0, %v1403
          %v1405 = vpop.f32.mrf.mxu0
          %1406 = vmatprep.mubr.bf16.mxu0 0
          %1407 = vmatmul.mubr.bf16.gmra.mxu0 %v1274
          %v1408 = vpop.f32.mrf.mxu0
          %v1409 = vadd.f32 0.0, %v1408
          %v1410 = vpop.f32.mrf.mxu0
          %v1411 = vpop.f32.mrf.mxu0
          %v1412 = vadd.f32 0.0, %v1411
          %v1413 = vpop.f32.mrf.mxu0
          %1414 = vmatprep.mubr.bf16.mxu0 0
          %1415 = vmatmul.mubr.bf16.gmra.mxu0 %v1275
          %v1416 = vpop.f32.mrf.mxu0
          %v1417 = vadd.f32 0.0, %v1416
          %v1418 = vpop.f32.mrf.mxu0
          %v1419 = vpop.f32.mrf.mxu0
          %v1420 = vadd.f32 0.0, %v1419
          %v1421 = vpop.f32.mrf.mxu0
          %1422 = vmatprep.mubr.bf16.mxu0 0
          %1423 = vmatmul.mubr.bf16.gmra.mxu0 %v1276
          %v1424 = vpop.f32.mrf.mxu0
          %v1425 = vadd.f32 0.0, %v1424
          %v1426 = vpop.f32.mrf.mxu0
          %v1427 = vpop.f32.mrf.mxu0
          %v1428 = vadd.f32 0.0, %v1427
          %v1429 = vpop.f32.mrf.mxu0
          %1430 = vmatprep.mubr.bf16.mxu0 0
          %1431 = vmatmul.mubr.bf16.gmra.mxu0 %v1277
          %v1432 = vpop.f32.mrf.mxu0
          %v1433 = vadd.f32 0.0, %v1432
          %v1434 = vpop.f32.mrf.mxu0
          %v1435 = vpop.f32.mrf.mxu0
          %v1436 = vadd.f32 0.0, %v1435
          %v1437 = vpop.f32.mrf.mxu0
          %1438 = vdwg.mxu0
          %v1439 = vpack.c.bf16 %v1380, %v1377
          %v1440 = vpack.c.bf16 %v1388, %v1385
          %v1441 = vpack.c.bf16 %v1396, %v1393
          %v1442 = vpack.c.bf16 %v1404, %v1401
          %v1443 = vpack.c.bf16 %v1412, %v1409
          %v1444 = vpack.c.bf16 %v1420, %v1417
          %v1445 = vpack.c.bf16 %v1428, %v1425
          %v1446 = vpack.c.bf16 %v1436, %v1433
          %v1455 = vunpack.c.l.b16 %v1439
          %v1456 = vunpack.c.h.b16 %v1439
          %v1457 = vunpack.c.l.b16 %v1440
          %v1458 = vunpack.c.h.b16 %v1440
          %v1459 = vunpack.c.l.b16 %v1441
          %v1460 = vunpack.c.h.b16 %v1441
          %v1461 = vunpack.c.l.b16 %v1442
          %v1462 = vunpack.c.h.b16 %v1442
          %v1463 = vunpack.c.l.b16 %v1443
          %v1464 = vunpack.c.h.b16 %v1443
          %v1465 = vunpack.c.l.b16 %v1444
          %v1466 = vunpack.c.h.b16 %v1444
          %v1467 = vunpack.c.l.b16 %v1445
          %v1468 = vunpack.c.h.b16 %v1445
          %v1469 = vunpack.c.l.b16 %v1446
          %v1470 = vunpack.c.h.b16 %v1446
          %v1471 = vpack.c.b16 %v1455, %v1455
          %v1472 = vpack.c.b16 %v1456, %v1456
          %v1473 = vpack.c.b16 %v1457, %v1457
          %v1474 = vpack.c.b16 %v1458, %v1458
          %v1475 = vpack.c.b16 %v1459, %v1459
          %v1476 = vpack.c.b16 %v1460, %v1460
          %v1477 = vpack.c.b16 %v1461, %v1461
          %v1478 = vpack.c.b16 %v1462, %v1462
          %v1479 = vpack.c.b16 %v1463, %v1463
          %v1480 = vpack.c.b16 %v1464, %v1464
          %v1481 = vpack.c.b16 %v1465, %v1465
          %v1482 = vpack.c.b16 %v1466, %v1466
          %v1483 = vpack.c.b16 %v1467, %v1467
          %v1484 = vpack.c.b16 %v1468, %v1468
          %v1485 = vpack.c.b16 %v1469, %v1469
          %v1486 = vpack.c.b16 %v1470, %v1470
          %1503 = vst [vmem:[%s516] sm:$0xf] %v1471
          %1504 = vst [vmem:[%s516 + $0x4] sm:$0xf] %v1472
          %1505 = vst [vmem:[%s516 + $0x8] sm:$0xf] %v1473
          %1506 = vst [vmem:[%s516 + $0xc] sm:$0xf] %v1474
          %1507 = vst [vmem:[%s516 + $0x10] sm:$0xf] %v1475
          %1508 = vst [vmem:[%s516 + $0x14] sm:$0xf] %v1476
          %1509 = vst [vmem:[%s516 + $0x18] sm:$0xf] %v1477
          %1510 = vst [vmem:[%s516 + $0x1c] sm:$0xf] %v1478
          %1511 = vst [vmem:[%s516 + $0x20] sm:$0xf] %v1479
          %1512 = vst [vmem:[%s516 + $0x24] sm:$0xf] %v1480
          %1513 = vst [vmem:[%s516 + $0x28] sm:$0xf] %v1481
          %1514 = vst [vmem:[%s516 + $0x2c] sm:$0xf] %v1482
          %1515 = vst [vmem:[%s516 + $0x30] sm:$0xf] %v1483
          %1516 = vst [vmem:[%s516 + $0x34] sm:$0xf] %v1484
          %1517 = vst [vmem:[%s516 + $0x38] sm:$0xf] %v1485
          %1518 = vst [vmem:[%s516 + $0x3c] sm:$0xf] %v1486
          %v1519 = vld [vmem:[%s6] sm:$0xf]
          %v1520 = vld [vmem:[%s6 + $0x4] sm:$0xf]
          %v1521 = vld [vmem:[%s6 + $0x8] sm:$0xf]
          %v1522 = vld [vmem:[%s6 + $0xc] sm:$0xf]
          %v1523 = vld [vmem:[%s6 + $0x10] sm:$0xf]
          %v1524 = vld [vmem:[%s6 + $0x14] sm:$0xf]
          %v1525 = vld [vmem:[%s6 + $0x18] sm:$0xf]
          %v1526 = vld [vmem:[%s6 + $0x1c] sm:$0xf]
          %v1527 = vld [vmem:[%s6 + $0x20] sm:$0xf]
          %v1528 = vld [vmem:[%s6 + $0x24] sm:$0xf]
          %v1529 = vld [vmem:[%s6 + $0x28] sm:$0xf]
          %v1530 = vld [vmem:[%s6 + $0x2c] sm:$0xf]
          %v1531 = vld [vmem:[%s6 + $0x30] sm:$0xf]
          %v1532 = vld [vmem:[%s6 + $0x34] sm:$0xf]
          %v1533 = vld [vmem:[%s6 + $0x38] sm:$0xf]
          %v1534 = vld [vmem:[%s6 + $0x3c] sm:$0xf]
          %v1535 = vld [vmem:[%s8] sm:$0x1]
          %v1537 = vlaneseq
          %v1538 = vshrl.u32 %v1537, 7
          %v1539 = vsub.s32 0, %v1538
          %v1540 = vrot.slane %v1535, %v1539
          %v1558 = vunpack.c.l.b16 %v1519
          %v1559 = vunpack.c.l.b16 %v1520
          %v1560 = vunpack.c.l.b16 %v1521
          %v1561 = vunpack.c.l.b16 %v1522
          %v1562 = vunpack.c.l.b16 %v1523
          %v1563 = vunpack.c.l.b16 %v1524
          %v1564 = vunpack.c.l.b16 %v1525
          %v1565 = vunpack.c.l.b16 %v1526
          %v1566 = vunpack.c.l.b16 %v1527
          %v1567 = vunpack.c.l.b16 %v1528
          %v1568 = vunpack.c.l.b16 %v1529
          %v1569 = vunpack.c.l.b16 %v1530
          %v1570 = vunpack.c.l.b16 %v1531
          %v1571 = vunpack.c.l.b16 %v1532
          %v1572 = vunpack.c.l.b16 %v1533
          %v1573 = vunpack.c.l.b16 %v1534
          %v1574 = vpack.c.b16 %v1559, %v1558
          %v1575 = vpack.c.b16 %v1561, %v1560
          %v1576 = vpack.c.b16 %v1563, %v1562
          %v1577 = vpack.c.b16 %v1565, %v1564
          %v1578 = vpack.c.b16 %v1567, %v1566
          %v1579 = vpack.c.b16 %v1569, %v1568
          %v1580 = vpack.c.b16 %v1571, %v1570
          %v1581 = vpack.c.b16 %v1573, %v1572
          %1590 = vmatprep.subr.bf16.mxu0 0
          %1591 = vmatpush1.bf16.msra.mxu0 %v1581
          %1592 = vmatprep.subr.bf16.mxu0 0
          %1593 = vmatpush1.bf16.msra.mxu0 %v1580
          %1594 = vmatprep.subr.bf16.mxu0 0
          %1595 = vmatpush1.bf16.msra.mxu0 %v1579
          %1596 = vmatprep.subr.bf16.mxu0 0
          %1597 = vmatpush1.bf16.msra.mxu0 %v1578
          %1598 = vmatprep.subr.bf16.mxu0 0
          %1599 = vmatpush1.bf16.msra.mxu0 %v1577
          %1600 = vmatprep.subr.bf16.mxu0 0
          %1601 = vmatpush1.bf16.msra.mxu0 %v1576
          %1602 = vmatprep.subr.bf16.mxu0 0
          %1603 = vmatpush1.bf16.msra.mxu0 %v1575
          %1604 = vmatprep.subr.bf16.mxu0 0
          %1605 = vmatpush1.bf16.msra.mxu0 %v1574
          %1606 = vmatprep.subr.bf16.mxu0 0
          %1607 = vmatpush2.bf16.msra.mxu0 0
          %1608 = vmatprep.subr.bf16.mxu0 0
          %1609 = vmatpush2.bf16.msra.mxu0 0
          %1610 = vmatprep.subr.bf16.mxu0 0
          %1611 = vmatpush2.bf16.msra.mxu0 0
          %1612 = vmatprep.subr.bf16.mxu0 0
          %1613 = vmatpush2.bf16.msra.mxu0 0
          %1614 = vmatprep.subr.bf16.mxu0 0
          %1615 = vmatpush2.bf16.msra.mxu0 0
          %1616 = vmatprep.subr.bf16.mxu0 0
          %1617 = vmatpush2.bf16.msra.mxu0 0
          %1618 = vmatprep.subr.bf16.mxu0 0
          %1619 = vmatpush2.bf16.msra.mxu0 0
          %1620 = vmatprep.subr.bf16.mxu0 0
          %1621 = vmatpush2.bf16.msra.mxu0 0
          %1622 = vmatprep.mubr.bf16.mxu0 0
          %1623 = vmatmul.mubr.bf16.gmra.mxu0 %v1270
          %v1624 = vpop.f32.mrf.mxu0
          %v1625 = vadd.f32 %v1540, %v1624
          %v1626 = vpop.f32.mrf.mxu0
          %v1627 = vpop.f32.mrf.mxu0
          %v1628 = vadd.f32 %v1540, %v1627
          %v1629 = vpop.f32.mrf.mxu0
          %1630 = vmatprep.mubr.bf16.mxu0 0
          %1631 = vmatmul.mubr.bf16.gmra.mxu0 %v1271
          %v1632 = vpop.f32.mrf.mxu0
          %v1633 = vadd.f32 %v1540, %v1632
          %v1634 = vpop.f32.mrf.mxu0
          %v1635 = vpop.f32.mrf.mxu0
          %v1636 = vadd.f32 %v1540, %v1635
          %v1637 = vpop.f32.mrf.mxu0
          %1638 = vmatprep.mubr.bf16.mxu0 0
          %1639 = vmatmul.mubr.bf16.gmra.mxu0 %v1272
          %v1640 = vpop.f32.mrf.mxu0
          %v1641 = vadd.f32 %v1540, %v1640
          %v1642 = vpop.f32.mrf.mxu0
          %v1643 = vpop.f32.mrf.mxu0
          %v1644 = vadd.f32 %v1540, %v1643
          %v1645 = vpop.f32.mrf.mxu0
          %1646 = vmatprep.mubr.bf16.mxu0 0
          %1647 = vmatmul.mubr.bf16.gmra.mxu0 %v1273
          %v1648 = vpop.f32.mrf.mxu0
          %v1649 = vadd.f32 %v1540, %v1648
          %v1650 = vpop.f32.mrf.mxu0
          %v1651 = vpop.f32.mrf.mxu0
          %v1652 = vadd.f32 %v1540, %v1651
          %v1653 = vpop.f32.mrf.mxu0
          %1654 = vmatprep.mubr.bf16.mxu0 0
          %1655 = vmatmul.mubr.bf16.gmra.mxu0 %v1274
          %v1656 = vpop.f32.mrf.mxu0
          %v1657 = vadd.f32 %v1540, %v1656
          %v1658 = vpop.f32.mrf.mxu0
          %v1659 = vpop.f32.mrf.mxu0
          %v1660 = vadd.f32 %v1540, %v1659
          %v1661 = vpop.f32.mrf.mxu0
          %1662 = vmatprep.mubr.bf16.mxu0 0
          %1663 = vmatmul.mubr.bf16.gmra.mxu0 %v1275
          %v1664 = vpop.f32.mrf.mxu0
          %v1665 = vadd.f32 %v1540, %v1664
          %v1666 = vpop.f32.mrf.mxu0
          %v1667 = vpop.f32.mrf.mxu0
          %v1668 = vadd.f32 %v1540, %v1667
          %v1669 = vpop.f32.mrf.mxu0
          %1670 = vmatprep.mubr.bf16.mxu0 0
          %1671 = vmatmul.mubr.bf16.gmra.mxu0 %v1276
          %v1672 = vpop.f32.mrf.mxu0
          %v1673 = vadd.f32 %v1540, %v1672
          %v1674 = vpop.f32.mrf.mxu0
          %v1675 = vpop.f32.mrf.mxu0
          %v1676 = vadd.f32 %v1540, %v1675
          %v1677 = vpop.f32.mrf.mxu0
          %1678 = vmatprep.mubr.bf16.mxu0 0
          %1679 = vmatmul.mubr.bf16.gmra.mxu0 %v1277
          %v1680 = vpop.f32.mrf.mxu0
          %v1681 = vadd.f32 %v1540, %v1680
          %v1682 = vpop.f32.mrf.mxu0
          %v1683 = vpop.f32.mrf.mxu0
          %v1684 = vadd.f32 %v1540, %v1683
          %v1685 = vpop.f32.mrf.mxu0
          %1686 = vdwg.mxu0
          %1687 = vst [vmem:[%s510] sm:$0xff] %v1625
          %1688 = vst [vmem:[%s510 + $0x8] sm:$0xff] %v1628
          %1689 = vst [vmem:[%s510 + $0x10] sm:$0xff] %v1633
          %1690 = vst [vmem:[%s510 + $0x18] sm:$0xff] %v1636
          %1691 = vst [vmem:[%s510 + $0x20] sm:$0xff] %v1641
          %1692 = vst [vmem:[%s510 + $0x28] sm:$0xff] %v1644
          %1693 = vst [vmem:[%s510 + $0x30] sm:$0xff] %v1649
          %1694 = vst [vmem:[%s510 + $0x38] sm:$0xff] %v1652
          %1695 = vst [vmem:[%s510 + $0x40] sm:$0xff] %v1657
          %1696 = vst [vmem:[%s510 + $0x48] sm:$0xff] %v1660
          %1697 = vst [vmem:[%s510 + $0x50] sm:$0xff] %v1665
          %1698 = vst [vmem:[%s510 + $0x58] sm:$0xff] %v1668
          %1699 = vst [vmem:[%s510 + $0x60] sm:$0xff] %v1673
          %1700 = vst [vmem:[%s510 + $0x68] sm:$0xff] %v1676
          %1701 = vst [vmem:[%s510 + $0x70] sm:$0xff] %v1681
          %1702 = vst [vmem:[%s510 + $0x78] sm:$0xff] %v1684
        $region105: #{sage_forward.2} parent=92 // pred_fallthru
          _
        %s1703 = smul.u32 16, %s26
        %p1704 = scmp.lt.s32.totalorder %s1703, 31
        %s1705 = scalar_select %p1704, %s1703, 31
        %s1706 = smul.addr %s1705, 8
        %s1707 = scalar_lea.vmem %s9, %s1706
        %s1708 = smul.u32 16, %s26
        %p1709 = scmp.lt.s32.totalorder %s1708, 31
        %s1710 = scalar_select %p1709, %s1708, 31
        %s1711 = smul.addr %s1710, 4
        %s1712 = scalar_lea.vmem %s10, %s1711
        // Predicated region
        $region106: #{sage_forward.2} parent=92 // pred_check
          %p1713 = pneg %p253
        $region107: #{sage_forward.2} parent=92 // pred_check_branch
          %1715 = sbr.rel (%p1713) target = $region109
        $region108: #{sage_forward.2} parent=92 // pred_region
          %s1716 = smul.u32 16, %s26
        $region109: #{sage_forward.2} parent=92 // pred_fallthru
          _
        // Predicated region
        $region110: #{sage_forward.2} parent=92 // pred_check
          %p1717 = pneg %p279
        $region111: #{sage_forward.2} parent=92 // pred_check_branch
          %1719 = sbr.rel (%p1717) target = $region113
        $region112: #{sage_forward.2} parent=92 // pred_region
          %s1720 = smul.u32 16, %s26
        $region113: #{sage_forward.2} parent=92 // pred_fallthru
          _
      $region93: #{sage_forward.2} parent=5 // pred_fallthru
        _
      %p1721 = scmp.le.s32.totalorder 2, %s17
      // Predicated region
      $region114: #{sage_forward.2} parent=5 // pred_check
        %p1722 = pneg %p1721
      $region115: #{sage_forward.2} parent=5 // pred_check_branch
        %1724 = sbr.rel (%p1722) target = $region117
      $region116: #{sage_forward.2} parent=5 // pred_region
        %s1725 = ssub.s32 %s17, 2
        // Predicated region
        $region118: #{sage_forward.2} parent=116 // pred_check
          %p1726 = pneg %p259
        $region119: #{sage_forward.2} parent=116 // pred_check_branch
          %1728 = sbr.rel (%p1726) target = $region121
        $region120: #{sage_forward.2} parent=116 // pred_region
          %s1729 = smul.u32 16, %s28
          %p1730 = scmp.lt.s32.totalorder %s1729, 31
          %s1731 = scalar_select %p1730, %s1729, 31
          %s1732 = smul.addr %s1731, 8
          %s1733 = scalar_lea.vmem %s9, %s1732
        $region121: #{sage_forward.2} parent=116 // pred_fallthru
          _
        // Predicated region
        $region122: #{sage_forward.2} parent=116 // pred_check
          %p1734 = pneg %p285
        $region123: #{sage_forward.2} parent=116 // pred_check_branch
          %1736 = sbr.rel (%p1734) target = $region125
        $region124: #{sage_forward.2} parent=116 // pred_region
          %s1737 = smul.u32 16, %s28
          %p1738 = scmp.lt.s32.totalorder %s1737, 31
          %s1739 = scalar_select %p1738, %s1737, 31
          %s1740 = smul.addr %s1739, 4
          %s1741 = scalar_lea.vmem %s10, %s1740
        $region125: #{sage_forward.2} parent=116 // pred_fallthru
          _
      $region117: #{sage_forward.2} parent=5 // pred_fallthru
        _
    $region6: #{sage_forward.2} parent=1 // loop_footer
      %s21 = sadd.s32 1, %s17
    $region7: #{sage_forward.2} parent=1 // loop_footer_branch
      %16 = sbr.rel target = $region3
    $region8: #{sage_forward.2} parent=1 // loop_exit
      _

</llo_original>
